<compile_context>
chip_gen: v7x
topology: tpu7x:2x2x1
jax: 0.10.0
libtpu: 0.0.40
codegen_flags: <defaults>
</compile_context>

<pallas_src>
import math

import jax
import jax.numpy as jnp
import numpy as np
from jax import lax
from jax.experimental import pallas as pl
from jax.experimental.pallas import tpu as pltpu


# --------------------------------------------------------------------------
# Fused kernel: all LSTM layers + decoder, grid over sequence chunks
# --------------------------------------------------------------------------
def _make_fused_kernel(nlayers, ts, batch, hid, vocab):
    H, B = hid, batch

    def kernel(*refs):
        # inputs : x, h0, c0, (wx, wh, b) * L, wd, bd
        # outputs: out, logits, hn, cn        scratch: act_sc (bf16)
        x_ref, h0_ref, c0_ref = refs[0], refs[1], refs[2]
        p = 3
        layers = []
        for _ in range(nlayers):
            layers.append((refs[p], refs[p + 1], refs[p + 2]))
            p += 3
        wd_ref, bd_ref = refs[p], refs[p + 1]
        out_ref, logits_ref, hn_ref, cn_ref = refs[p + 2:p + 6]
        act_sc = refs[p + 6]

        chunk = pl.program_id(0)

        # hn/cn are resident output blocks and double as the h/c carry
        # across sequence chunks; initialise them from (h0, c0) on chunk 0.
        @pl.when(chunk == 0)
        def _():
            hn_ref[...] = h0_ref[...]
            cn_ref[...] = c0_ref[...]

        for l, (wx_ref, wh_ref, b_ref) in enumerate(layers):
            x_in = x_ref[...] if l == 0 else act_sc[...]        # bf16 (rows, In)
            # Hoisted whole-chunk input projection (+ folded b_ih+b_hh bias):
            # one big MXU matmul outside the serial recurrence.
            xg = jnp.dot(x_in, wx_ref[...],
                         preferred_element_type=jnp.float32) + b_ref[...]
            wh = wh_ref[...]
            h = hn_ref[l * B:(l + 1) * B, :]                    # f32 (B, H)
            c = cn_ref[l * B:(l + 1) * B, :]
            # Statically unrolled recurrence over the chunk: only the small
            # (B,H)x(H,4H) matmul and 3 EUP passes remain on the serial path.
            for t in range(ts):
                gates = xg[t * B:(t + 1) * B, :] + jnp.dot(
                    h.astype(wh.dtype), wh,
                    preferred_element_type=jnp.float32)
                sig = jax.nn.sigmoid(gates[:, :3 * H])          # packed [i|f|o]
                g = jnp.tanh(gates[:, 3 * H:])                  # [g]
                c = sig[:, H:2 * H] * c + sig[:, :H] * g
                h = sig[:, 2 * H:3 * H] * jnp.tanh(c)
                act_sc[t * B:(t + 1) * B, :] = h.astype(act_sc.dtype)
            hn_ref[l * B:(l + 1) * B, :] = h
            cn_ref[l * B:(l + 1) * B, :] = c

        acts = act_sc[...]                                      # bf16 last-layer h
        out_ref[...] = acts.astype(out_ref.dtype)
        # Fused decoder: bf16 activations fed straight into the (H, V) matmul;
        # V is a multiple of 128 -> lane-dense output stores.
        logits_ref[...] = (jnp.dot(acts, wd_ref[...],
                                   preferred_element_type=jnp.float32)
                           + bd_ref[...]).astype(logits_ref.dtype)

    return kernel


# --------------------------------------------------------------------------
# VMEM budgeting / chunk selection helpers
# --------------------------------------------------------------------------
def _padded_bytes(shape, dtype):
    itemsize = np.dtype(dtype).itemsize
    shape = tuple(int(d) for d in shape)
    if len(shape) < 2:
        shape = (1,) * (2 - len(shape)) + shape
    sub_tile = 8 * max(1, 4 // itemsize)          # f32: 8 sublanes, bf16: 16
    lead = 1
    for d in shape[:-2]:
        lead *= d
    sub = -(-shape[-2] // sub_tile) * sub_tile
    lane = -(-shape[-1] // 128) * 128
    return lead * sub * lane * itemsize


def _vmem_cap():
    try:
        return int(0.85 * pltpu.get_tpu_info().vmem_capacity_bytes)
    except Exception:
        return 48 << 20           # conservative: fits v5e/v6e (128M) and v7x (64M)


def _vmem_budget(block_specs, scratch_specs):
    need = 2 * sum(_padded_bytes(s, d) for s, d in block_specs)  # double-buffer
    need += sum(_padded_bytes(s, d) for s, d in scratch_specs)
    need += 2 << 20                                              # headroom
    return int(min(_vmem_cap(), max(4 << 20, need)))


def _pick_chunk_len(S, B):
    """Smallest chunk length dividing S whose row count (Ts*B) fills whole
    8-sublane tiles: keeps chunk blocks aligned and the unrolled loop short."""
    for ts in range(1, S + 1):
        if S % ts == 0 and (ts * B) % 8 == 0:
            return ts
    return S


# --------------------------------------------------------------------------
# pallas_call wrapper
# --------------------------------------------------------------------------
def _fused_forward(x2d, h0f, c0f, params, S, B, ts):
    rows = ts * B
    n_chunks = S // ts
    In0 = x2d.shape[1]
    L = len(params["lstm"])
    H = h0f.shape[1]
    wd, bd = params["decoder"]
    V = wd.shape[1]

    args = [x2d, h0f, c0f]
    in_specs = [
        pl.BlockSpec((rows, In0), lambda t: (t, 0)),             # x chunk
        pl.BlockSpec((L * B, H), lambda t: (0, 0)),              # h0 (resident)
        pl.BlockSpec((L * B, H), lambda t: (0, 0)),              # c0 (resident)
    ]
    for wx, wh, b in params["lstm"]:                             # resident weights
        args += [wx, wh, b]
        in_specs += [pl.BlockSpec(wx.shape, lambda t: (0, 0)),
                     pl.BlockSpec(wh.shape, lambda t: (0, 0)),
                     pl.BlockSpec(b.shape, lambda t: (0, 0))]
    args += [wd, bd]
    in_specs += [pl.BlockSpec(wd.shape, lambda t: (0, 0)),
                 pl.BlockSpec(bd.shape, lambda t: (0, 0))]

    out_shape = (
        jax.ShapeDtypeStruct((S * B, H), jnp.float32),           # output view
        jax.ShapeDtypeStruct((S * B, V), jnp.float32),           # decoder logits
        jax.ShapeDtypeStruct((L * B, H), jnp.float32),           # h_N
        jax.ShapeDtypeStruct((L * B, H), jnp.float32),           # c_N
    )
    out_specs = [
        pl.BlockSpec((rows, H), lambda t: (t, 0)),
        pl.BlockSpec((rows, V), lambda t: (t, 0)),
        pl.BlockSpec((L * B, H), lambda t: (0, 0)),              # resident carry
        pl.BlockSpec((L * B, H), lambda t: (0, 0)),              # resident carry
    ]
    scratch_shapes = [pltpu.VMEM((rows, H), jnp.bfloat16)]

    block_bytes = [((rows, In0), x2d.dtype)]
    block_bytes += [(tuple(a.shape), a.dtype) for a in args[1:]]
    block_bytes += [((rows, H), jnp.float32), ((rows, V), jnp.float32),
                    ((L * B, H), jnp.float32), ((L * B, H), jnp.float32)]
    vmem_limit = _vmem_budget(block_bytes, [((rows, H), jnp.bfloat16)])

    grid_spec = pltpu.PrefetchScalarGridSpec(
        num_scalar_prefetch=0,
        grid=(n_chunks,),
        in_specs=in_specs,
        out_specs=out_specs,
        scratch_shapes=scratch_shapes,
    )
    return pl.pallas_call(
        _make_fused_kernel(L, ts, B, H, V),
        out_shape=out_shape,
        grid_spec=grid_spec,
        compiler_params=pltpu.CompilerParams(
            dimension_semantics=("arbitrary",),   # h/c carry -> serial chunks
            vmem_limit_bytes=vmem_limit),
    )(*args)


# --------------------------------------------------------------------------
# Model forward (matches RNNModel.forward's (output, hidden) in eval mode,
# plus the decoder logits it computes internally for the loss)
# --------------------------------------------------------------------------
def rnn_model_forward(tokens, hidden, params):
    """tokens: (S, B) int32; hidden = (h0, c0), each (L, B, H) f32.

    Returns (output, (hN, cN), logits):
      output: (S*B, H) f32  -- dropout(LSTM outputs).view(S*B, H), eval mode
      hN, cN: (L, B, H) f32
      logits: (S*B, V) f32  -- self.decoder(output)
    The torch.utils.checkpoint chunking of the original forward is a memory
    optimization only; the sequence-chunked grid computes the same math.
    """
    S, B = tokens.shape
    h0, c0 = hidden
    L, _, H = h0.shape
    emb = jnp.take(params["embedding"], tokens, axis=0)          # gather (wrapper)
    x2d = emb.astype(jnp.bfloat16).reshape(S * B, emb.shape[-1])  # dropout == id
    ts = _pick_chunk_len(S, B)
    out2d, logits, hn, cn = _fused_forward(
        x2d, h0.reshape(L * B, H), c0.reshape(L * B, H), params, S, B, ts)
    return out2d, (hn.reshape(L, B, H), cn.reshape(L, B, H)), logits


# --------------------------------------------------------------------------
# Parameters (PyTorch-style init; bf16 weights, folded f32 bias, gates [i|f|o|g])
# --------------------------------------------------------------------------
def _reorder_ifgo_to_ifog(w, axis):
    i, f, g, o = jnp.split(w, 4, axis=axis)
    return jnp.concatenate([i, f, o, g], axis=axis)


def make_params(key, ntoken, ninp, nhid, nlayers):
    ks = jax.random.split(key, 2 + 4 * nlayers)
    it = iter(ks)
    initrange = 0.1
    f32 = jnp.float32

    emb = jax.random.uniform(next(it), (ntoken, ninp), f32, -initrange, initrange)

    lstm = []
    for l in range(nlayers):
        In = ninp if l == 0 else nhid
        k = 1.0 / math.sqrt(nhid)
        w_ih = jax.random.uniform(next(it), (4 * nhid, In), f32, -k, k)     # torch
        w_hh = jax.random.uniform(next(it), (4 * nhid, nhid), f32, -k, k)   # [i,f,g,o]
        b_ih = jax.random.uniform(next(it), (4 * nhid,), f32, -k, k)
        b_hh = jax.random.uniform(next(it), (4 * nhid,), f32, -k, k)
        wx = _reorder_ifgo_to_ifog(w_ih.T, axis=1).astype(jnp.bfloat16)     # (In,4H)
        wh = _reorder_ifgo_to_ifog(w_hh.T, axis=1).astype(jnp.bfloat16)     # (H, 4H)
        b = _reorder_ifgo_to_ifog((b_ih + b_hh).reshape(1, 4 * nhid), axis=1)
        lstm.append((wx, wh, b))

    w_dec = jax.random.uniform(next(it), (ntoken, nhid), f32, -initrange, initrange)
    wd = w_dec.T.astype(jnp.bfloat16)                                       # (H, V)
    bd = jnp.zeros((1, ntoken), f32)
    return {"embedding": emb, "lstm": lstm, "decoder": (wd, bd)}


# --------------------------------------------------------------------------
# Pure-JAX reference (same bf16-in / f32-accumulate arithmetic, same packing)
# --------------------------------------------------------------------------
def _reference_forward(tokens, hidden, params):
    emb = jnp.take(params["embedding"], tokens, axis=0)
    x = emb.astype(jnp.bfloat16)                         # (S, B, In)
    S, B, _ = x.shape
    h0s, c0s = hidden
    hs, cs = [], []
    for l, (wx, wh, b) in enumerate(params["lstm"]):
        In = x.shape[-1]
        H = wh.shape[0]
        xg_all = (jnp.dot(x.reshape(S * B, In), wx,
                          preferred_element_type=jnp.float32)
                  + b).reshape(S, B, 4 * H)

        def step(carry, xg_t, wh=wh, H=H):
            h, c = carry
            gates = xg_t + jnp.dot(h.astype(jnp.bfloat16), wh,
                                   preferred_element_type=jnp.float32)
            sig = jax.nn.sigmoid(gates[:, :3 * H])
            g = jnp.tanh(gates[:, 3 * H:])
            c = sig[:, H:2 * H] * c + sig[:, :H] * g
            h = sig[:, 2 * H:3 * H] * jnp.tanh(c)
            return (h, c), h.astype(jnp.bfloat16)

        (hN, cN), ys = lax.scan(step, (h0s[l], c0s[l]), xg_all)
        x = ys
        hs.append(hN)
        cs.append(cN)
    out = x.astype(jnp.float32).reshape(S * B, -1)
    wd, bd = params["decoder"]
    logits = jnp.dot(x.reshape(S * B, -1), wd,
                     preferred_element_type=jnp.float32) + bd
    return out, logits, (jnp.stack(hs), jnp.stack(cs))


# --------------------------------------------------------------------------
if __name__ == "__main__":
    # small shapes: seq=8, batch=2, ninp=nhid=32, 2 LSTM layers, vocab=128
    S, B = 8, 2
    ntoken, ninp, nhid, nlayers = 128, 32, 32, 2

    key = jax.random.PRNGKey(0)
    k_tok, k_par = jax.random.split(key)
    tokens = jax.random.randint(k_tok, (S, B), 0, ntoken, dtype=jnp.int32)
    params = make_params(k_par, ntoken, ninp, nhid, nlayers)

    # init_hidden(bsz): zeros for (h0, c0)
    h0 = jnp.zeros((nlayers, B, nhid), jnp.float32)
    c0 = jnp.zeros((nlayers, B, nhid), jnp.float32)

    fwd = jax.jit(rnn_model_forward)
    output, (hN, cN), logits = fwd(tokens, (h0, c0), params)
    output = jax.block_until_ready(output)
    logits = jax.block_until_ready(logits)

    # correctness vs. pure-JAX reference (same bf16/f32 arithmetic)
    ref_out, ref_logits, (ref_h, ref_c) = _reference_forward(
        tokens, (h0, c0), params)

    assert output.shape == (S * B, nhid)
    assert hN.shape == (nlayers, B, nhid) and cN.shape == (nlayers, B, nhid)
    assert logits.shape == (S * B, ntoken)
    assert jnp.allclose(output, ref_out, atol=1e-2, rtol=1e-2)
    assert jnp.allclose(hN, ref_h, atol=1e-2, rtol=1e-2)
    assert jnp.allclose(cN, ref_c, atol=1e-2, rtol=1e-2)
    assert jnp.allclose(logits, ref_logits, atol=1e-2, rtol=1e-2)

    print("KERNEL_OK")
</pallas_src>

<mosaic_0001>
module attributes {stable_mosaic.version = 11 : i64} {
  func.func @kernel(%arg0: i32, %arg1: memref<8x32xbf16, #tpu.memory_space<vmem>>, %arg2: memref<4x32xf32, #tpu.memory_space<vmem>>, %arg3: memref<4x32xf32, #tpu.memory_space<vmem>>, %arg4: memref<32x128xbf16, #tpu.memory_space<vmem>>, %arg5: memref<32x128xbf16, #tpu.memory_space<vmem>>, %arg6: memref<1x128xf32, #tpu.memory_space<vmem>>, %arg7: memref<32x128xbf16, #tpu.memory_space<vmem>>, %arg8: memref<32x128xbf16, #tpu.memory_space<vmem>>, %arg9: memref<1x128xf32, #tpu.memory_space<vmem>>, %arg10: memref<32x128xbf16, #tpu.memory_space<vmem>>, %arg11: memref<1x128xf32, #tpu.memory_space<vmem>>, %arg12: memref<8x32xf32, #tpu.memory_space<vmem>>, %arg13: memref<8x128xf32, #tpu.memory_space<vmem>>, %arg14: memref<4x32xf32, #tpu.memory_space<vmem>>, %arg15: memref<4x32xf32, #tpu.memory_space<vmem>>, %arg16: memref<8x32xbf16, #tpu.memory_space<vmem>>) attributes {dimension_semantics = [#tpu.dimension_semantics<arbitrary>], iteration_bounds = array<i64: 2>, scalar_prefetch = 0 : i64, scratch_operands = 1 : i64, tpu.core_type = #tpu.core_type<tc>, window_params = [{transform_indices = @transform_0, window_bounds = array<i64: 8, 32>}, {pipeline_mode = #tpu.pipeline_mode<synchronous>, transform_indices = @transform_1, window_bounds = array<i64: 4, 32>}, {pipeline_mode = #tpu.pipeline_mode<synchronous>, transform_indices = @transform_2, window_bounds = array<i64: 4, 32>}, {pipeline_mode = #tpu.pipeline_mode<synchronous>, transform_indices = @transform_3, window_bounds = array<i64: 32, 128>}, {pipeline_mode = #tpu.pipeline_mode<synchronous>, transform_indices = @transform_4, window_bounds = array<i64: 32, 128>}, {pipeline_mode = #tpu.pipeline_mode<synchronous>, transform_indices = @transform_5, window_bounds = array<i64: 1, 128>}, {pipeline_mode = #tpu.pipeline_mode<synchronous>, transform_indices = @transform_6, window_bounds = array<i64: 32, 128>}, {pipeline_mode = #tpu.pipeline_mode<synchronous>, transform_indices = @transform_7, window_bounds = array<i64: 32, 128>}, {pipeline_mode = #tpu.pipeline_mode<synchronous>, transform_indices = @transform_8, window_bounds = array<i64: 1, 128>}, {pipeline_mode = #tpu.pipeline_mode<synchronous>, transform_indices = @transform_9, window_bounds = array<i64: 32, 128>}, {pipeline_mode = #tpu.pipeline_mode<synchronous>, transform_indices = @transform_10, window_bounds = array<i64: 1, 128>}, {transform_indices = @transform_11, window_bounds = array<i64: 8, 32>}, {transform_indices = @transform_12, window_bounds = array<i64: 8, 128>}, {pipeline_mode = #tpu.pipeline_mode<synchronous>, transform_indices = @transform_13, window_bounds = array<i64: 4, 32>}, {pipeline_mode = #tpu.pipeline_mode<synchronous>, transform_indices = @transform_14, window_bounds = array<i64: 4, 32>}]} {
    %c0_i32 = arith.constant 0 : i32
    %0 = arith.cmpi eq, %arg0, %c0_i32 : i32
    %1 = arith.extui %0 : i1 to i32
    %c0_i32_0 = arith.constant 0 : i32
    %2 = arith.cmpi ne, %1, %c0_i32_0 : i32
    scf.if %2 {
      %c0_73 = arith.constant 0 : index
      %c0_74 = arith.constant 0 : index
      %210 = vector.load %arg2[%c0_73, %c0_74] : memref<4x32xf32, #tpu.memory_space<vmem>>, vector<4x32xf32>
      %c0_75 = arith.constant 0 : index
      %c0_76 = arith.constant 0 : index
      %211 = vector.load %arg14[%c0_75, %c0_76] : memref<4x32xf32, #tpu.memory_space<vmem>>, vector<4x32xf32>
      tpu.vector_store %arg14[%c0_75, %c0_76], %210 {strides = array<i32>} : memref<4x32xf32, #tpu.memory_space<vmem>>, vector<4x32xf32>,
      %c0_77 = arith.constant 0 : index
      %c0_78 = arith.constant 0 : index
      %212 = vector.load %arg3[%c0_77, %c0_78] : memref<4x32xf32, #tpu.memory_space<vmem>>, vector<4x32xf32>
      %c0_79 = arith.constant 0 : index
      %c0_80 = arith.constant 0 : index
      %213 = vector.load %arg15[%c0_79, %c0_80] : memref<4x32xf32, #tpu.memory_space<vmem>>, vector<4x32xf32>
      tpu.vector_store %arg15[%c0_79, %c0_80], %212 {strides = array<i32>} : memref<4x32xf32, #tpu.memory_space<vmem>>, vector<4x32xf32>,
    } else {
    }
    %c0 = arith.constant 0 : index
    %c0_1 = arith.constant 0 : index
    %3 = vector.load %arg1[%c0, %c0_1] : memref<8x32xbf16, #tpu.memory_space<vmem>>, vector<8x32xbf16>
    %c0_2 = arith.constant 0 : index
    %c0_3 = arith.constant 0 : index
    %4 = vector.load %arg4[%c0_2, %c0_3] : memref<32x128xbf16, #tpu.memory_space<vmem>>, vector<32x128xbf16>
    %cst = arith.constant dense<0.000000e+00> : vector<8x128xf32>
    %5 = tpu.matmul %3, %4, %cst {dimension_numbers = #tpu.dot_dimension_numbers<[1], [0], [0], [1], [0, 0, 1, 1], [], []>} : vector<8x32xbf16>, vector<32x128xbf16>, vector<8x128xf32> -> vector<8x128xf32>
    %c0_4 = arith.constant 0 : index
    %c0_5 = arith.constant 0 : index
    %6 = vector.load %arg6[%c0_4, %c0_5] : memref<1x128xf32, #tpu.memory_space<vmem>>, vector<1x128xf32>
    %7 = vector.broadcast %6 : vector<1x128xf32> to vector<8x128xf32>
    %8 = arith.addf %5, %7 : vector<8x128xf32>
    %c0_6 = arith.constant 0 : index
    %c0_7 = arith.constant 0 : index
    %9 = vector.load %arg5[%c0_6, %c0_7] : memref<32x128xbf16, #tpu.memory_space<vmem>>, vector<32x128xbf16>
    %c0_8 = arith.constant 0 : index
    %c0_9 = arith.constant 0 : index
    %10 = vector.load %arg14[%c0_8, %c0_9] : memref<4x32xf32, #tpu.memory_space<vmem>>, vector<2x32xf32>
    %c0_10 = arith.constant 0 : index
    %c0_11 = arith.constant 0 : index
    %11 = vector.load %arg15[%c0_10, %c0_11] : memref<4x32xf32, #tpu.memory_space<vmem>>, vector<2x32xf32>
    %12 = vector.extract_strided_slice %8 {offsets = [0, 0], sizes = [2, 128], strides = [1, 1]} : vector<8x128xf32> to vector<2x128xf32>
    %13 = arith.truncf %10 : vector<2x32xf32> to vector<2x32xbf16>
    %cst_12 = arith.constant dense<0.000000e+00> : vector<2x128xf32>
    %14 = tpu.matmul %13, %9, %cst_12 {dimension_numbers = #tpu.dot_dimension_numbers<[1], [0], [0], [1], [0, 0, 1, 1], [], []>} : vector<2x32xbf16>, vector<32x128xbf16>, vector<2x128xf32> -> vector<2x128xf32>
    %15 = arith.addf %12, %14 : vector<2x128xf32>
    %16 = vector.extract_strided_slice %15 {offsets = [0, 0], sizes = [2, 96], strides = [1, 1]} : vector<2x128xf32> to vector<2x96xf32>
    %17 = arith.negf %16 : vector<2x96xf32>
    %18 = math.exp %17 : vector<2x96xf32>
    %cst_13 = arith.constant 1.000000e+00 : f32
    %19 = vector.broadcast %cst_13 : f32 to vector<2x96xf32>
    %20 = arith.addf %19, %18 : vector<2x96xf32>
    %21 = arith.divf %19, %20 : vector<2x96xf32>
    %22 = vector.extract_strided_slice %15 {offsets = [0, 96], sizes = [2, 32], strides = [1, 1]} : vector<2x128xf32> to vector<2x32xf32>
    %23 = math.tanh %22 : vector<2x32xf32>
    %24 = vector.extract_strided_slice %21 {offsets = [0, 32], sizes = [2, 32], strides = [1, 1]} : vector<2x96xf32> to vector<2x32xf32>
    %25 = arith.mulf %24, %11 : vector<2x32xf32>
    %26 = vector.extract_strided_slice %21 {offsets = [0, 0], sizes = [2, 32], strides = [1, 1]} : vector<2x96xf32> to vector<2x32xf32>
    %27 = arith.mulf %26, %23 : vector<2x32xf32>
    %28 = arith.addf %25, %27 : vector<2x32xf32>
    %29 = vector.extract_strided_slice %21 {offsets = [0, 64], sizes = [2, 32], strides = [1, 1]} : vector<2x96xf32> to vector<2x32xf32>
    %30 = math.tanh %28 : vector<2x32xf32>
    %31 = arith.mulf %29, %30 : vector<2x32xf32>
    %32 = arith.truncf %31 : vector<2x32xf32> to vector<2x32xbf16>
    %c0_14 = arith.constant 0 : index
    %c0_15 = arith.constant 0 : index
    %33 = vector.load %arg16[%c0_14, %c0_15] : memref<8x32xbf16, #tpu.memory_space<vmem>>, vector<2x32xbf16>
    tpu.vector_store %arg16[%c0_14, %c0_15], %32 {strides = array<i32>} : memref<8x32xbf16, #tpu.memory_space<vmem>>, vector<2x32xbf16>,
    %34 = vector.extract_strided_slice %8 {offsets = [2, 0], sizes = [2, 128], strides = [1, 1]} : vector<8x128xf32> to vector<2x128xf32>
    %35 = arith.truncf %31 : vector<2x32xf32> to vector<2x32xbf16>
    %cst_16 = arith.constant dense<0.000000e+00> : vector<2x128xf32>
    %36 = tpu.matmul %35, %9, %cst_16 {dimension_numbers = #tpu.dot_dimension_numbers<[1], [0], [0], [1], [0, 0, 1, 1], [], []>} : vector<2x32xbf16>, vector<32x128xbf16>, vector<2x128xf32> -> vector<2x128xf32>
    %37 = arith.addf %34, %36 : vector<2x128xf32>
    %38 = vector.extract_strided_slice %37 {offsets = [0, 0], sizes = [2, 96], strides = [1, 1]} : vector<2x128xf32> to vector<2x96xf32>
    %39 = arith.negf %38 : vector<2x96xf32>
    %40 = math.exp %39 : vector<2x96xf32>
    %cst_17 = arith.constant 1.000000e+00 : f32
    %41 = vector.broadcast %cst_17 : f32 to vector<2x96xf32>
    %42 = arith.addf %41, %40 : vector<2x96xf32>
    %43 = arith.divf %41, %42 : vector<2x96xf32>
    %44 = vector.extract_strided_slice %37 {offsets = [0, 96], sizes = [2, 32], strides = [1, 1]} : vector<2x128xf32> to vector<2x32xf32>
    %45 = math.tanh %44 : vector<2x32xf32>
    %46 = vector.extract_strided_slice %43 {offsets = [0, 32], sizes = [2, 32], strides = [1, 1]} : vector<2x96xf32> to vector<2x32xf32>
    %47 = arith.mulf %46, %28 : vector<2x32xf32>
    %48 = vector.extract_strided_slice %43 {offsets = [0, 0], sizes = [2, 32], strides = [1, 1]} : vector<2x96xf32> to vector<2x32xf32>
    %49 = arith.mulf %48, %45 : vector<2x32xf32>
    %50 = arith.addf %47, %49 : vector<2x32xf32>
    %51 = vector.extract_strided_slice %43 {offsets = [0, 64], sizes = [2, 32], strides = [1, 1]} : vector<2x96xf32> to vector<2x32xf32>
    %52 = math.tanh %50 : vector<2x32xf32>
    %53 = arith.mulf %51, %52 : vector<2x32xf32>
    %54 = arith.truncf %53 : vector<2x32xf32> to vector<2x32xbf16>
    %c2 = arith.constant 2 : index
    %c0_18 = arith.constant 0 : index
    %55 = vector.load %arg16[%c2, %c0_18] : memref<8x32xbf16, #tpu.memory_space<vmem>>, vector<2x32xbf16>
    tpu.vector_store %arg16[%c2, %c0_18], %54 {strides = array<i32>} : memref<8x32xbf16, #tpu.memory_space<vmem>>, vector<2x32xbf16>,
    %56 = vector.extract_strided_slice %8 {offsets = [4, 0], sizes = [2, 128], strides = [1, 1]} : vector<8x128xf32> to vector<2x128xf32>
    %57 = arith.truncf %53 : vector<2x32xf32> to vector<2x32xbf16>
    %cst_19 = arith.constant dense<0.000000e+00> : vector<2x128xf32>
    %58 = tpu.matmul %57, %9, %cst_19 {dimension_numbers = #tpu.dot_dimension_numbers<[1], [0], [0], [1], [0, 0, 1, 1], [], []>} : vector<2x32xbf16>, vector<32x128xbf16>, vector<2x128xf32> -> vector<2x128xf32>
    %59 = arith.addf %56, %58 : vector<2x128xf32>
    %60 = vector.extract_strided_slice %59 {offsets = [0, 0], sizes = [2, 96], strides = [1, 1]} : vector<2x128xf32> to vector<2x96xf32>
    %61 = arith.negf %60 : vector<2x96xf32>
    %62 = math.exp %61 : vector<2x96xf32>
    %cst_20 = arith.constant 1.000000e+00 : f32
    %63 = vector.broadcast %cst_20 : f32 to vector<2x96xf32>
    %64 = arith.addf %63, %62 : vector<2x96xf32>
    %65 = arith.divf %63, %64 : vector<2x96xf32>
    %66 = vector.extract_strided_slice %59 {offsets = [0, 96], sizes = [2, 32], strides = [1, 1]} : vector<2x128xf32> to vector<2x32xf32>
    %67 = math.tanh %66 : vector<2x32xf32>
    %68 = vector.extract_strided_slice %65 {offsets = [0, 32], sizes = [2, 32], strides = [1, 1]} : vector<2x96xf32> to vector<2x32xf32>
    %69 = arith.mulf %68, %50 : vector<2x32xf32>
    %70 = vector.extract_strided_slice %65 {offsets = [0, 0], sizes = [2, 32], strides = [1, 1]} : vector<2x96xf32> to vector<2x32xf32>
    %71 = arith.mulf %70, %67 : vector<2x32xf32>
    %72 = arith.addf %69, %71 : vector<2x32xf32>
    %73 = vector.extract_strided_slice %65 {offsets = [0, 64], sizes = [2, 32], strides = [1, 1]} : vector<2x96xf32> to vector<2x32xf32>
    %74 = math.tanh %72 : vector<2x32xf32>
    %75 = arith.mulf %73, %74 : vector<2x32xf32>
    %76 = arith.truncf %75 : vector<2x32xf32> to vector<2x32xbf16>
    %c4 = arith.constant 4 : index
    %c0_21 = arith.constant 0 : index
    %77 = vector.load %arg16[%c4, %c0_21] : memref<8x32xbf16, #tpu.memory_space<vmem>>, vector<2x32xbf16>
    tpu.vector_store %arg16[%c4, %c0_21], %76 {strides = array<i32>} : memref<8x32xbf16, #tpu.memory_space<vmem>>, vector<2x32xbf16>,
    %78 = vector.extract_strided_slice %8 {offsets = [6, 0], sizes = [2, 128], strides = [1, 1]} : vector<8x128xf32> to vector<2x128xf32>
    %79 = arith.truncf %75 : vector<2x32xf32> to vector<2x32xbf16>
    %cst_22 = arith.constant dense<0.000000e+00> : vector<2x128xf32>
    %80 = tpu.matmul %79, %9, %cst_22 {dimension_numbers = #tpu.dot_dimension_numbers<[1], [0], [0], [1], [0, 0, 1, 1], [], []>} : vector<2x32xbf16>, vector<32x128xbf16>, vector<2x128xf32> -> vector<2x128xf32>
    %81 = arith.addf %78, %80 : vector<2x128xf32>
    %82 = vector.extract_strided_slice %81 {offsets = [0, 0], sizes = [2, 96], strides = [1, 1]} : vector<2x128xf32> to vector<2x96xf32>
    %83 = arith.negf %82 : vector<2x96xf32>
    %84 = math.exp %83 : vector<2x96xf32>
    %cst_23 = arith.constant 1.000000e+00 : f32
    %85 = vector.broadcast %cst_23 : f32 to vector<2x96xf32>
    %86 = arith.addf %85, %84 : vector<2x96xf32>
    %87 = arith.divf %85, %86 : vector<2x96xf32>
    %88 = vector.extract_strided_slice %81 {offsets = [0, 96], sizes = [2, 32], strides = [1, 1]} : vector<2x128xf32> to vector<2x32xf32>
    %89 = math.tanh %88 : vector<2x32xf32>
    %90 = vector.extract_strided_slice %87 {offsets = [0, 32], sizes = [2, 32], strides = [1, 1]} : vector<2x96xf32> to vector<2x32xf32>
    %91 = arith.mulf %90, %72 : vector<2x32xf32>
    %92 = vector.extract_strided_slice %87 {offsets = [0, 0], sizes = [2, 32], strides = [1, 1]} : vector<2x96xf32> to vector<2x32xf32>
    %93 = arith.mulf %92, %89 : vector<2x32xf32>
    %94 = arith.addf %91, %93 : vector<2x32xf32>
    %95 = vector.extract_strided_slice %87 {offsets = [0, 64], sizes = [2, 32], strides = [1, 1]} : vector<2x96xf32> to vector<2x32xf32>
    %96 = math.tanh %94 : vector<2x32xf32>
    %97 = arith.mulf %95, %96 : vector<2x32xf32>
    %98 = arith.truncf %97 : vector<2x32xf32> to vector<2x32xbf16>
    %c6 = arith.constant 6 : index
    %c0_24 = arith.constant 0 : index
    %99 = vector.load %arg16[%c6, %c0_24] : memref<8x32xbf16, #tpu.memory_space<vmem>>, vector<2x32xbf16>
    tpu.vector_store %arg16[%c6, %c0_24], %98 {strides = array<i32>} : memref<8x32xbf16, #tpu.memory_space<vmem>>, vector<2x32xbf16>,
    %c0_25 = arith.constant 0 : index
    %c0_26 = arith.constant 0 : index
    %100 = vector.load %arg14[%c0_25, %c0_26] : memref<4x32xf32, #tpu.memory_space<vmem>>, vector<2x32xf32>
    tpu.vector_store %arg14[%c0_25, %c0_26], %97 {strides = array<i32>} : memref<4x32xf32, #tpu.memory_space<vmem>>, vector<2x32xf32>,
    %c0_27 = arith.constant 0 : index
    %c0_28 = arith.constant 0 : index
    %101 = vector.load %arg15[%c0_27, %c0_28] : memref<4x32xf32, #tpu.memory_space<vmem>>, vector<2x32xf32>
    tpu.vector_store %arg15[%c0_27, %c0_28], %94 {strides = array<i32>} : memref<4x32xf32, #tpu.memory_space<vmem>>, vector<2x32xf32>,
    %c0_29 = arith.constant 0 : index
    %c0_30 = arith.constant 0 : index
    %102 = vector.load %arg16[%c0_29, %c0_30] : memref<8x32xbf16, #tpu.memory_space<vmem>>, vector<8x32xbf16>
    %c0_31 = arith.constant 0 : index
    %c0_32 = arith.constant 0 : index
    %103 = vector.load %arg7[%c0_31, %c0_32] : memref<32x128xbf16, #tpu.memory_space<vmem>>, vector<32x128xbf16>
    %cst_33 = arith.constant dense<0.000000e+00> : vector<8x128xf32>
    %104 = tpu.matmul %102, %103, %cst_33 {dimension_numbers = #tpu.dot_dimension_numbers<[1], [0], [0], [1], [0, 0, 1, 1], [], []>} : vector<8x32xbf16>, vector<32x128xbf16>, vector<8x128xf32> -> vector<8x128xf32>
    %c0_34 = arith.constant 0 : index
    %c0_35 = arith.constant 0 : index
    %105 = vector.load %arg9[%c0_34, %c0_35] : memref<1x128xf32, #tpu.memory_space<vmem>>, vector<1x128xf32>
    %106 = vector.broadcast %105 : vector<1x128xf32> to vector<8x128xf32>
    %107 = arith.addf %104, %106 : vector<8x128xf32>
    %c0_36 = arith.constant 0 : index
    %c0_37 = arith.constant 0 : index
    %108 = vector.load %arg8[%c0_36, %c0_37] : memref<32x128xbf16, #tpu.memory_space<vmem>>, vector<32x128xbf16>
    %c2_38 = arith.constant 2 : index
    %c0_39 = arith.constant 0 : index
    %109 = vector.load %arg14[%c2_38, %c0_39] : memref<4x32xf32, #tpu.memory_space<vmem>>, vector<2x32xf32>
    %c2_40 = arith.constant 2 : index
    %c0_41 = arith.constant 0 : index
    %110 = vector.load %arg15[%c2_40, %c0_41] : memref<4x32xf32, #tpu.memory_space<vmem>>, vector<2x32xf32>
    %111 = vector.extract_strided_slice %107 {offsets = [0, 0], sizes = [2, 128], strides = [1, 1]} : vector<8x128xf32> to vector<2x128xf32>
    %112 = arith.truncf %109 : vector<2x32xf32> to vector<2x32xbf16>
    %cst_42 = arith.constant dense<0.000000e+00> : vector<2x128xf32>
    %113 = tpu.matmul %112, %108, %cst_42 {dimension_numbers = #tpu.dot_dimension_numbers<[1], [0], [0], [1], [0, 0, 1, 1], [], []>} : vector<2x32xbf16>, vector<32x128xbf16>, vector<2x128xf32> -> vector<2x128xf32>
    %114 = arith.addf %111, %113 : vector<2x128xf32>
    %115 = vector.extract_strided_slice %114 {offsets = [0, 0], sizes = [2, 96], strides = [1, 1]} : vector<2x128xf32> to vector<2x96xf32>
    %116 = arith.negf %115 : vector<2x96xf32>
    %117 = math.exp %116 : vector<2x96xf32>
    %cst_43 = arith.constant 1.000000e+00 : f32
    %118 = vector.broadcast %cst_43 : f32 to vector<2x96xf32>
    %119 = arith.addf %118, %117 : vector<2x96xf32>
    %120 = arith.divf %118, %119 : vector<2x96xf32>
    %121 = vector.extract_strided_slice %114 {offsets = [0, 96], sizes = [2, 32], strides = [1, 1]} : vector<2x128xf32> to vector<2x32xf32>
    %122 = math.tanh %121 : vector<2x32xf32>
    %123 = vector.extract_strided_slice %120 {offsets = [0, 32], sizes = [2, 32], strides = [1, 1]} : vector<2x96xf32> to vector<2x32xf32>
    %124 = arith.mulf %123, %110 : vector<2x32xf32>
    %125 = vector.extract_strided_slice %120 {offsets = [0, 0], sizes = [2, 32], strides = [1, 1]} : vector<2x96xf32> to vector<2x32xf32>
    %126 = arith.mulf %125, %122 : vector<2x32xf32>
    %127 = arith.addf %124, %126 : vector<2x32xf32>
    %128 = vector.extract_strided_slice %120 {offsets = [0, 64], sizes = [2, 32], strides = [1, 1]} : vector<2x96xf32> to vector<2x32xf32>
    %129 = math.tanh %127 : vector<2x32xf32>
    %130 = arith.mulf %128, %129 : vector<2x32xf32>
    %131 = arith.truncf %130 : vector<2x32xf32> to vector<2x32xbf16>
    %c0_44 = arith.constant 0 : index
    %c0_45 = arith.constant 0 : index
    %132 = vector.load %arg16[%c0_44, %c0_45] : memref<8x32xbf16, #tpu.memory_space<vmem>>, vector<2x32xbf16>
    tpu.vector_store %arg16[%c0_44, %c0_45], %131 {strides = array<i32>} : memref<8x32xbf16, #tpu.memory_space<vmem>>, vector<2x32xbf16>,
    %133 = vector.extract_strided_slice %107 {offsets = [2, 0], sizes = [2, 128], strides = [1, 1]} : vector<8x128xf32> to vector<2x128xf32>
    %134 = arith.truncf %130 : vector<2x32xf32> to vector<2x32xbf16>
    %cst_46 = arith.constant dense<0.000000e+00> : vector<2x128xf32>
    %135 = tpu.matmul %134, %108, %cst_46 {dimension_numbers = #tpu.dot_dimension_numbers<[1], [0], [0], [1], [0, 0, 1, 1], [], []>} : vector<2x32xbf16>, vector<32x128xbf16>, vector<2x128xf32> -> vector<2x128xf32>
    %136 = arith.addf %133, %135 : vector<2x128xf32>
    %137 = vector.extract_strided_slice %136 {offsets = [0, 0], sizes = [2, 96], strides = [1, 1]} : vector<2x128xf32> to vector<2x96xf32>
    %138 = arith.negf %137 : vector<2x96xf32>
    %139 = math.exp %138 : vector<2x96xf32>
    %cst_47 = arith.constant 1.000000e+00 : f32
    %140 = vector.broadcast %cst_47 : f32 to vector<2x96xf32>
    %141 = arith.addf %140, %139 : vector<2x96xf32>
    %142 = arith.divf %140, %141 : vector<2x96xf32>
    %143 = vector.extract_strided_slice %136 {offsets = [0, 96], sizes = [2, 32], strides = [1, 1]} : vector<2x128xf32> to vector<2x32xf32>
    %144 = math.tanh %143 : vector<2x32xf32>
    %145 = vector.extract_strided_slice %142 {offsets = [0, 32], sizes = [2, 32], strides = [1, 1]} : vector<2x96xf32> to vector<2x32xf32>
    %146 = arith.mulf %145, %127 : vector<2x32xf32>
    %147 = vector.extract_strided_slice %142 {offsets = [0, 0], sizes = [2, 32], strides = [1, 1]} : vector<2x96xf32> to vector<2x32xf32>
    %148 = arith.mulf %147, %144 : vector<2x32xf32>
    %149 = arith.addf %146, %148 : vector<2x32xf32>
    %150 = vector.extract_strided_slice %142 {offsets = [0, 64], sizes = [2, 32], strides = [1, 1]} : vector<2x96xf32> to vector<2x32xf32>
    %151 = math.tanh %149 : vector<2x32xf32>
    %152 = arith.mulf %150, %151 : vector<2x32xf32>
    %153 = arith.truncf %152 : vector<2x32xf32> to vector<2x32xbf16>
    %c2_48 = arith.constant 2 : index
    %c0_49 = arith.constant 0 : index
    %154 = vector.load %arg16[%c2_48, %c0_49] : memref<8x32xbf16, #tpu.memory_space<vmem>>, vector<2x32xbf16>
    tpu.vector_store %arg16[%c2_48, %c0_49], %153 {strides = array<i32>} : memref<8x32xbf16, #tpu.memory_space<vmem>>, vector<2x32xbf16>,
    %155 = vector.extract_strided_slice %107 {offsets = [4, 0], sizes = [2, 128], strides = [1, 1]} : vector<8x128xf32> to vector<2x128xf32>
    %156 = arith.truncf %152 : vector<2x32xf32> to vector<2x32xbf16>
    %cst_50 = arith.constant dense<0.000000e+00> : vector<2x128xf32>
    %157 = tpu.matmul %156, %108, %cst_50 {dimension_numbers = #tpu.dot_dimension_numbers<[1], [0], [0], [1], [0, 0, 1, 1], [], []>} : vector<2x32xbf16>, vector<32x128xbf16>, vector<2x128xf32> -> vector<2x128xf32>
    %158 = arith.addf %155, %157 : vector<2x128xf32>
    %159 = vector.extract_strided_slice %158 {offsets = [0, 0], sizes = [2, 96], strides = [1, 1]} : vector<2x128xf32> to vector<2x96xf32>
    %160 = arith.negf %159 : vector<2x96xf32>
    %161 = math.exp %160 : vector<2x96xf32>
    %cst_51 = arith.constant 1.000000e+00 : f32
    %162 = vector.broadcast %cst_51 : f32 to vector<2x96xf32>
    %163 = arith.addf %162, %161 : vector<2x96xf32>
    %164 = arith.divf %162, %163 : vector<2x96xf32>
    %165 = vector.extract_strided_slice %158 {offsets = [0, 96], sizes = [2, 32], strides = [1, 1]} : vector<2x128xf32> to vector<2x32xf32>
    %166 = math.tanh %165 : vector<2x32xf32>
    %167 = vector.extract_strided_slice %164 {offsets = [0, 32], sizes = [2, 32], strides = [1, 1]} : vector<2x96xf32> to vector<2x32xf32>
    %168 = arith.mulf %167, %149 : vector<2x32xf32>
    %169 = vector.extract_strided_slice %164 {offsets = [0, 0], sizes = [2, 32], strides = [1, 1]} : vector<2x96xf32> to vector<2x32xf32>
    %170 = arith.mulf %169, %166 : vector<2x32xf32>
    %171 = arith.addf %168, %170 : vector<2x32xf32>
    %172 = vector.extract_strided_slice %164 {offsets = [0, 64], sizes = [2, 32], strides = [1, 1]} : vector<2x96xf32> to vector<2x32xf32>
    %173 = math.tanh %171 : vector<2x32xf32>
    %174 = arith.mulf %172, %173 : vector<2x32xf32>
    %175 = arith.truncf %174 : vector<2x32xf32> to vector<2x32xbf16>
    %c4_52 = arith.constant 4 : index
    %c0_53 = arith.constant 0 : index
    %176 = vector.load %arg16[%c4_52, %c0_53] : memref<8x32xbf16, #tpu.memory_space<vmem>>, vector<2x32xbf16>
    tpu.vector_store %arg16[%c4_52, %c0_53], %175 {strides = array<i32>} : memref<8x32xbf16, #tpu.memory_space<vmem>>, vector<2x32xbf16>,
    %177 = vector.extract_strided_slice %107 {offsets = [6, 0], sizes = [2, 128], strides = [1, 1]} : vector<8x128xf32> to vector<2x128xf32>
    %178 = arith.truncf %174 : vector<2x32xf32> to vector<2x32xbf16>
    %cst_54 = arith.constant dense<0.000000e+00> : vector<2x128xf32>
    %179 = tpu.matmul %178, %108, %cst_54 {dimension_numbers = #tpu.dot_dimension_numbers<[1], [0], [0], [1], [0, 0, 1, 1], [], []>} : vector<2x32xbf16>, vector<32x128xbf16>, vector<2x128xf32> -> vector<2x128xf32>
    %180 = arith.addf %177, %179 : vector<2x128xf32>
    %181 = vector.extract_strided_slice %180 {offsets = [0, 0], sizes = [2, 96], strides = [1, 1]} : vector<2x128xf32> to vector<2x96xf32>
    %182 = arith.negf %181 : vector<2x96xf32>
    %183 = math.exp %182 : vector<2x96xf32>
    %cst_55 = arith.constant 1.000000e+00 : f32
    %184 = vector.broadcast %cst_55 : f32 to vector<2x96xf32>
    %185 = arith.addf %184, %183 : vector<2x96xf32>
    %186 = arith.divf %184, %185 : vector<2x96xf32>
    %187 = vector.extract_strided_slice %180 {offsets = [0, 96], sizes = [2, 32], strides = [1, 1]} : vector<2x128xf32> to vector<2x32xf32>
    %188 = math.tanh %187 : vector<2x32xf32>
    %189 = vector.extract_strided_slice %186 {offsets = [0, 32], sizes = [2, 32], strides = [1, 1]} : vector<2x96xf32> to vector<2x32xf32>
    %190 = arith.mulf %189, %171 : vector<2x32xf32>
    %191 = vector.extract_strided_slice %186 {offsets = [0, 0], sizes = [2, 32], strides = [1, 1]} : vector<2x96xf32> to vector<2x32xf32>
    %192 = arith.mulf %191, %188 : vector<2x32xf32>
    %193 = arith.addf %190, %192 : vector<2x32xf32>
    %194 = vector.extract_strided_slice %186 {offsets = [0, 64], sizes = [2, 32], strides = [1, 1]} : vector<2x96xf32> to vector<2x32xf32>
    %195 = math.tanh %193 : vector<2x32xf32>
    %196 = arith.mulf %194, %195 : vector<2x32xf32>
    %197 = arith.truncf %196 : vector<2x32xf32> to vector<2x32xbf16>
    %c6_56 = arith.constant 6 : index
    %c0_57 = arith.constant 0 : index
    %198 = vector.load %arg16[%c6_56, %c0_57] : memref<8x32xbf16, #tpu.memory_space<vmem>>, vector<2x32xbf16>
    tpu.vector_store %arg16[%c6_56, %c0_57], %197 {strides = array<i32>} : memref<8x32xbf16, #tpu.memory_space<vmem>>, vector<2x32xbf16>,
    %c2_58 = arith.constant 2 : index
    %c0_59 = arith.constant 0 : index
    %199 = vector.load %arg14[%c2_58, %c0_59] : memref<4x32xf32, #tpu.memory_space<vmem>>, vector<2x32xf32>
    tpu.vector_store %arg14[%c2_58, %c0_59], %196 {strides = array<i32>} : memref<4x32xf32, #tpu.memory_space<vmem>>, vector<2x32xf32>,
    %c2_60 = arith.constant 2 : index
    %c0_61 = arith.constant 0 : index
    %200 = vector.load %arg15[%c2_60, %c0_61] : memref<4x32xf32, #tpu.memory_space<vmem>>, vector<2x32xf32>
    tpu.vector_store %arg15[%c2_60, %c0_61], %193 {strides = array<i32>} : memref<4x32xf32, #tpu.memory_space<vmem>>, vector<2x32xf32>,
    %c0_62 = arith.constant 0 : index
    %c0_63 = arith.constant 0 : index
    %201 = vector.load %arg16[%c0_62, %c0_63] : memref<8x32xbf16, #tpu.memory_space<vmem>>, vector<8x32xbf16>
    %202 = arith.extf %201 : vector<8x32xbf16> to vector<8x32xf32>
    %c0_64 = arith.constant 0 : index
    %c0_65 = arith.constant 0 : index
    %203 = vector.load %arg12[%c0_64, %c0_65] : memref<8x32xf32, #tpu.memory_space<vmem>>, vector<8x32xf32>
    tpu.vector_store %arg12[%c0_64, %c0_65], %202 {strides = array<i32>} : memref<8x32xf32, #tpu.memory_space<vmem>>, vector<8x32xf32>,
    %c0_66 = arith.constant 0 : index
    %c0_67 = arith.constant 0 : index
    %204 = vector.load %arg10[%c0_66, %c0_67] : memref<32x128xbf16, #tpu.memory_space<vmem>>, vector<32x128xbf16>
    %cst_68 = arith.constant dense<0.000000e+00> : vector<8x128xf32>
    %205 = tpu.matmul %201, %204, %cst_68 {dimension_numbers = #tpu.dot_dimension_numbers<[1], [0], [0], [1], [0, 0, 1, 1], [], []>} : vector<8x32xbf16>, vector<32x128xbf16>, vector<8x128xf32> -> vector<8x128xf32>
    %c0_69 = arith.constant 0 : index
    %c0_70 = arith.constant 0 : index
    %206 = vector.load %arg11[%c0_69, %c0_70] : memref<1x128xf32, #tpu.memory_space<vmem>>, vector<1x128xf32>
    %207 = vector.broadcast %206 : vector<1x128xf32> to vector<8x128xf32>
    %208 = arith.addf %205, %207 : vector<8x128xf32>
    %c0_71 = arith.constant 0 : index
    %c0_72 = arith.constant 0 : index
    %209 = vector.load %arg13[%c0_71, %c0_72] : memref<8x128xf32, #tpu.memory_space<vmem>>, vector<8x128xf32>
    tpu.vector_store %arg13[%c0_71, %c0_72], %208 {strides = array<i32>} : memref<8x128xf32, #tpu.memory_space<vmem>>, vector<8x128xf32>,
    return
  }
  func.func @transform_0(%arg0: i32) -> (i32, i32) {
    %c0_i32 = arith.constant 0 : i32
    %c0_i32_0 = arith.constant 0 : i32
    return %arg0, %c0_i32 : i32, i32
  }
  func.func @transform_1(%arg0: i32) -> (i32, i32) {
    %c0_i32 = arith.constant 0 : i32
    %c0_i32_0 = arith.constant 0 : i32
    %c0_i32_1 = arith.constant 0 : i32
    return %c0_i32, %c0_i32_0 : i32, i32
  }
  func.func @transform_2(%arg0: i32) -> (i32, i32) {
    %c0_i32 = arith.constant 0 : i32
    %c0_i32_0 = arith.constant 0 : i32
    %c0_i32_1 = arith.constant 0 : i32
    return %c0_i32, %c0_i32_0 : i32, i32
  }
  func.func @transform_3(%arg0: i32) -> (i32, i32) {
    %c0_i32 = arith.constant 0 : i32
    %c0_i32_0 = arith.constant 0 : i32
    %c0_i32_1 = arith.constant 0 : i32
    return %c0_i32, %c0_i32_0 : i32, i32
  }
  func.func @transform_4(%arg0: i32) -> (i32, i32) {
    %c0_i32 = arith.constant 0 : i32
    %c0_i32_0 = arith.constant 0 : i32
    %c0_i32_1 = arith.constant 0 : i32
    return %c0_i32, %c0_i32_0 : i32, i32
  }
  func.func @transform_5(%arg0: i32) -> (i32, i32) {
    %c0_i32 = arith.constant 0 : i32
    %c0_i32_0 = arith.constant 0 : i32
    %c0_i32_1 = arith.constant 0 : i32
    return %c0_i32, %c0_i32_0 : i32, i32
  }
  func.func @transform_6(%arg0: i32) -> (i32, i32) {
    %c0_i32 = arith.constant 0 : i32
    %c0_i32_0 = arith.constant 0 : i32
    %c0_i32_1 = arith.constant 0 : i32
    return %c0_i32, %c0_i32_0 : i32, i32
  }
  func.func @transform_7(%arg0: i32) -> (i32, i32) {
    %c0_i32 = arith.constant 0 : i32
    %c0_i32_0 = arith.constant 0 : i32
    %c0_i32_1 = arith.constant 0 : i32
    return %c0_i32, %c0_i32_0 : i32, i32
  }
  func.func @transform_8(%arg0: i32) -> (i32, i32) {
    %c0_i32 = arith.constant 0 : i32
    %c0_i32_0 = arith.constant 0 : i32
    %c0_i32_1 = arith.constant 0 : i32
    return %c0_i32, %c0_i32_0 : i32, i32
  }
  func.func @transform_9(%arg0: i32) -> (i32, i32) {
    %c0_i32 = arith.constant 0 : i32
    %c0_i32_0 = arith.constant 0 : i32
    %c0_i32_1 = arith.constant 0 : i32
    return %c0_i32, %c0_i32_0 : i32, i32
  }
  func.func @transform_10(%arg0: i32) -> (i32, i32) {
    %c0_i32 = arith.constant 0 : i32
    %c0_i32_0 = arith.constant 0 : i32
    %c0_i32_1 = arith.constant 0 : i32
    return %c0_i32, %c0_i32_0 : i32, i32
  }
  func.func @transform_11(%arg0: i32) -> (i32, i32) {
    %c0_i32 = arith.constant 0 : i32
    %c0_i32_0 = arith.constant 0 : i32
    return %arg0, %c0_i32 : i32, i32
  }
  func.func @transform_12(%arg0: i32) -> (i32, i32) {
    %c0_i32 = arith.constant 0 : i32
    %c0_i32_0 = arith.constant 0 : i32
    return %arg0, %c0_i32 : i32, i32
  }
  func.func @transform_13(%arg0: i32) -> (i32, i32) {
    %c0_i32 = arith.constant 0 : i32
    %c0_i32_0 = arith.constant 0 : i32
    %c0_i32_1 = arith.constant 0 : i32
    return %c0_i32, %c0_i32_0 : i32, i32
  }
  func.func @transform_14(%arg0: i32) -> (i32, i32) {
    %c0_i32 = arith.constant 0 : i32
    %c0_i32_0 = arith.constant 0 : i32
    %c0_i32_1 = arith.constant 0 : i32
    return %c0_i32, %c0_i32_0 : i32, i32
  }
}

</mosaic_0001>

<llo_original>
// kernel: rnn_model_forward.1
$region0: #{rnn_model_forward.1}
  #allocation0 [shape = 'u32[]', space=smem, size = 0x4, offset = 0x4, fixed_abs, tag = 'smem constant byte address 0x4 - core index']
  #allocation1 [shape = 'u32[144,128]{1,0:T(1,128)}', space=vmem, size = 0x12000, scoped, tag = 'internal scratch']
  #allocation2 [shape = 'bf16[8,32]{1,0:T(8,128)(2,1)}', space=vmem, size = 0x800, scoped, tag = 'scratch operand']
  %s0 = inlined_call_operand.vmem [shape: bf16[16,32], index: 0, kind: input, shape index: {}]
  %s1 = inlined_call_operand.vmem [shape: f32[4,32], index: 1, kind: input, shape index: {}]
  %s2 = inlined_call_operand.vmem [shape: f32[4,32], index: 2, kind: input, shape index: {}]
  %s3 = inlined_call_operand.vmem [shape: bf16[32,128], index: 3, kind: input, shape index: {}]
  %s4 = inlined_call_operand.vmem [shape: bf16[32,128], index: 4, kind: input, shape index: {}]
  %s5 = inlined_call_operand.vmem [shape: f32[1,128], index: 5, kind: input, shape index: {}]
  %s6 = inlined_call_operand.vmem [shape: bf16[32,128], index: 6, kind: input, shape index: {}]
  %s7 = inlined_call_operand.vmem [shape: bf16[32,128], index: 7, kind: input, shape index: {}]
  %s8 = inlined_call_operand.vmem [shape: f32[1,128], index: 8, kind: input, shape index: {}]
  %s9 = inlined_call_operand.vmem [shape: bf16[32,128], index: 9, kind: input, shape index: {}]
  %s10 = inlined_call_operand.vmem [shape: f32[1,128], index: 10, kind: input, shape index: {}]
  %s11 = inlined_call_operand.hbm [shape: f32[16,32], index: 11, kind: output, shape index: {0}]
  %s12 = inlined_call_operand.hbm [shape: f32[16,128], index: 12, kind: output, shape index: {1}]
  %s13 = inlined_call_operand.hbm [shape: f32[4,32], index: 13, kind: output, shape index: {2}]
  %s14 = inlined_call_operand.hbm [shape: f32[4,32], index: 14, kind: output, shape index: {3}]
  %15 = xla_tuple %s11, %s12, %s13, %s14
  %s16 = sld [smem:[#allocation0]]
  $region105: #{rnn_model_forward.1} parent=0
    _
  %s18 = ssub.s32 1, %s16
  %s19 = scalar_select 0, %s18, %s16
  $region1: #{rnn_model_forward.1} parent=0
    #allocation3 [shape = 'u8[8192]{0}', space=vmem, size = 0x2000, scoped, tag = 'output window, operand 0']
    #allocation4 [shape = 's32[2]{0}', space=sflag, size = 0x8, scoped, tag = 'scoped memory for rnn_model_forward.1']
    #allocation5 [shape = 'u8[8192]{0}', space=vmem, size = 0x2000, scoped, tag = 'output window, operand 1']
    #allocation6 [shape = 's32[2]{0}', space=sflag, size = 0x8, scoped, tag = 'scoped memory for rnn_model_forward.1']
    #allocation7 [shape = 'u8[2048]{0}', space=vmem, size = 0x800, scoped, tag = 'output window, operand 2, single buffered']
    #allocation8 [shape = 'u8[2048]{0}', space=vmem, size = 0x800, scoped, tag = 'output window, operand 3, single buffered']
    #allocation9 [shape = 's32[1]{0}', space=sflag, size = 0x4, scoped, tag = 'scoped memory for rnn_model_forward.1']
    %20 = vsyncpa [#allocation4], 0
    %s21 = scalar_lea.sflag [#allocation4], 1
    %22 = vsyncpa %s21, 0
    %23 = vsyncpa [#allocation6], 0
    %s24 = scalar_lea.sflag [#allocation6], 1
    %25 = vsyncpa %s24, 0
    %26 = vsyncpa [#allocation9], 0
    loop: start=0, step=1, limit=4
    $region2: #{rnn_model_forward.1} parent=1 // loop_pre_header
      _
    $region3: #{rnn_model_forward.1} parent=1 // loop_header
      %s28 = sphi 0, %s32
      %p29 = scmp.ge.s32.totalorder %s28, 4
      %s38 = sphi 0, %s40
      %s41 = sphi 0, %s38
      %s42 = sphi 0, %s41
      %s58 = sphi 0, %s42
      %s62 = sphi 0, %s62
      %s64 = sphi 0, %s62
      %s65 = sphi 0, %s64
      %s79 = sphi 0, %s65
      %s83 = sphi 0, %s83
      %s85 = sphi 0, %s83
      %s86 = sphi 0, %s85
      %s100 = sphi 0, %s86
      %s104 = sphi 0, %s104
      %s106 = sphi 0, %s104
      %s107 = sphi 0, %s106
      %s121 = sphi 0, %s107
      %s125 = sphi 0, %s125
      %s127 = sphi 0, %s125
      %s128 = sphi 0, %s127
      %s142 = sphi 0, %s128
      %s146 = sphi 0, %s146
      %s148 = sphi 0, %s146
      %s149 = sphi 0, %s148
      %s163 = sphi 0, %s149
      %s167 = sphi 0, %s167
      %s169 = sphi 0, %s167
      %s170 = sphi 0, %s169
      %s184 = sphi 0, %s170
      %s188 = sphi 0, %s188
      %s190 = sphi 0, %s188
      %s191 = sphi 0, %s190
      %s205 = sphi 0, %s191
      %s209 = sphi 0, %s209
      %s211 = sphi 0, %s209
      %s212 = sphi 0, %s211
      %s226 = sphi 0, %s212
      %s230 = sphi 0, %s230
      %s232 = sphi 0, %s230
      %s233 = sphi 0, %s232
      %s247 = sphi 0, %s233
      %s251 = sphi 0, %s251
      %s253 = sphi 0, %s251
      %s254 = sphi 0, %s253
      %s268 = sphi 0, %s254
      %s274 = sphi 0, %s276
      %s277 = sphi 0, %s274
      %s278 = sphi 0, %s277
      %s294 = sphi 0, %s278
      %s300 = sphi 0, %s302
      %s303 = sphi 0, %s300
      %s304 = sphi 0, %s303
      %s320 = sphi 0, %s304
      %s324 = sphi 0, %s324
      %s326 = sphi 0, %s324
      %s327 = sphi 0, %s326
      %s341 = sphi 0, %s327
      %s345 = sphi 0, %s345
      %s347 = sphi 0, %s345
      %s348 = sphi 0, %s347
      %s362 = sphi 0, %s348
    $region4: #{rnn_model_forward.1} parent=1 // loop_header_branch
      %31 = sbr.rel (%p29) target = $region8
    $region5: #{rnn_model_forward.1} parent=1 // loop_body
      %s33 = ssub.s32 %s28, 1
      %s34 = ssub.s32 %s28, 2
      %s35 = sadd.s32 %s28, 1
      %s36 = ssub.s32 %s28, %s35
      %p37 = scmp.eq.s32.totalorder %s36, 0
      %s39 = sadd.s32 %s38, 1
      %s40 = scalar_select %p37, %s38, %s39
      %p43 = pneg %p37
      %p44 = scmp.eq.s32.totalorder %s28, 1
      %p45 = por %p43, %p44
      %p46 = scmp.ne.s32.totalorder %s38, %s41
      %p47 = scmp.eq.s32.totalorder %s28, 0
      %p48 = por %p46, %p47
      %p49 = scmp.ne.s32.totalorder %s38, %s41
      %p50 = scmp.eq.s32.totalorder %s33, 1
      %p51 = por %p49, %p50
      %p52 = scmp.ne.s32.totalorder %s41, %s42
      %p53 = scmp.eq.s32.totalorder %s33, 0
      %p54 = por %p52, %p53
      %p55 = scmp.ne.s32.totalorder %s41, %s42
      %p56 = scmp.eq.s32.totalorder %s34, 1
      %p57 = por %p55, %p56
      %p59 = scmp.ne.s32.totalorder %s42, %s58
      %p60 = scmp.eq.s32.totalorder %s34, 0
      %p61 = por %p59, %p60
      %s63 = sadd.s32 %s62, 1
      %p66 = scmp.eq.s32.totalorder %s28, 1
      %p67 = scmp.ne.s32.totalorder %s62, %s64
      %p68 = scmp.eq.s32.totalorder %s28, 0
      %p69 = por %p67, %p68
      %p70 = scmp.ne.s32.totalorder %s62, %s64
      %p71 = scmp.eq.s32.totalorder %s33, 1
      %p72 = por %p70, %p71
      %p73 = scmp.ne.s32.totalorder %s64, %s65
      %p74 = scmp.eq.s32.totalorder %s33, 0
      %p75 = por %p73, %p74
      %p76 = scmp.ne.s32.totalorder %s64, %s65
      %p77 = scmp.eq.s32.totalorder %s34, 1
      %p78 = por %p76, %p77
      %p80 = scmp.ne.s32.totalorder %s65, %s79
      %p81 = scmp.eq.s32.totalorder %s34, 0
      %p82 = por %p80, %p81
      %s84 = sadd.s32 %s83, 1
      %p87 = scmp.eq.s32.totalorder %s28, 1
      %p88 = scmp.ne.s32.totalorder %s83, %s85
      %p89 = scmp.eq.s32.totalorder %s28, 0
      %p90 = por %p88, %p89
      %p91 = scmp.ne.s32.totalorder %s83, %s85
      %p92 = scmp.eq.s32.totalorder %s33, 1
      %p93 = por %p91, %p92
      %p94 = scmp.ne.s32.totalorder %s85, %s86
      %p95 = scmp.eq.s32.totalorder %s33, 0
      %p96 = por %p94, %p95
      %p97 = scmp.ne.s32.totalorder %s85, %s86
      %p98 = scmp.eq.s32.totalorder %s34, 1
      %p99 = por %p97, %p98
      %p101 = scmp.ne.s32.totalorder %s86, %s100
      %p102 = scmp.eq.s32.totalorder %s34, 0
      %p103 = por %p101, %p102
      %s105 = sadd.s32 %s104, 1
      %p108 = scmp.eq.s32.totalorder %s28, 1
      %p109 = scmp.ne.s32.totalorder %s104, %s106
      %p110 = scmp.eq.s32.totalorder %s28, 0
      %p111 = por %p109, %p110
      %p112 = scmp.ne.s32.totalorder %s104, %s106
      %p113 = scmp.eq.s32.totalorder %s33, 1
      %p114 = por %p112, %p113
      %p115 = scmp.ne.s32.totalorder %s106, %s107
      %p116 = scmp.eq.s32.totalorder %s33, 0
      %p117 = por %p115, %p116
      %p118 = scmp.ne.s32.totalorder %s106, %s107
      %p119 = scmp.eq.s32.totalorder %s34, 1
      %p120 = por %p118, %p119
      %p122 = scmp.ne.s32.totalorder %s107, %s121
      %p123 = scmp.eq.s32.totalorder %s34, 0
      %p124 = por %p122, %p123
      %s126 = sadd.s32 %s125, 1
      %p129 = scmp.eq.s32.totalorder %s28, 1
      %p130 = scmp.ne.s32.totalorder %s125, %s127
      %p131 = scmp.eq.s32.totalorder %s28, 0
      %p132 = por %p130, %p131
      %p133 = scmp.ne.s32.totalorder %s125, %s127
      %p134 = scmp.eq.s32.totalorder %s33, 1
      %p135 = por %p133, %p134
      %p136 = scmp.ne.s32.totalorder %s127, %s128
      %p137 = scmp.eq.s32.totalorder %s33, 0
      %p138 = por %p136, %p137
      %p139 = scmp.ne.s32.totalorder %s127, %s128
      %p140 = scmp.eq.s32.totalorder %s34, 1
      %p141 = por %p139, %p140
      %p143 = scmp.ne.s32.totalorder %s128, %s142
      %p144 = scmp.eq.s32.totalorder %s34, 0
      %p145 = por %p143, %p144
      %s147 = sadd.s32 %s146, 1
      %p150 = scmp.eq.s32.totalorder %s28, 1
      %p151 = scmp.ne.s32.totalorder %s146, %s148
      %p152 = scmp.eq.s32.totalorder %s28, 0
      %p153 = por %p151, %p152
      %p154 = scmp.ne.s32.totalorder %s146, %s148
      %p155 = scmp.eq.s32.totalorder %s33, 1
      %p156 = por %p154, %p155
      %p157 = scmp.ne.s32.totalorder %s148, %s149
      %p158 = scmp.eq.s32.totalorder %s33, 0
      %p159 = por %p157, %p158
      %p160 = scmp.ne.s32.totalorder %s148, %s149
      %p161 = scmp.eq.s32.totalorder %s34, 1
      %p162 = por %p160, %p161
      %p164 = scmp.ne.s32.totalorder %s149, %s163
      %p165 = scmp.eq.s32.totalorder %s34, 0
      %p166 = por %p164, %p165
      %s168 = sadd.s32 %s167, 1
      %p171 = scmp.eq.s32.totalorder %s28, 1
      %p172 = scmp.ne.s32.totalorder %s167, %s169
      %p173 = scmp.eq.s32.totalorder %s28, 0
      %p174 = por %p172, %p173
      %p175 = scmp.ne.s32.totalorder %s167, %s169
      %p176 = scmp.eq.s32.totalorder %s33, 1
      %p177 = por %p175, %p176
      %p178 = scmp.ne.s32.totalorder %s169, %s170
      %p179 = scmp.eq.s32.totalorder %s33, 0
      %p180 = por %p178, %p179
      %p181 = scmp.ne.s32.totalorder %s169, %s170
      %p182 = scmp.eq.s32.totalorder %s34, 1
      %p183 = por %p181, %p182
      %p185 = scmp.ne.s32.totalorder %s170, %s184
      %p186 = scmp.eq.s32.totalorder %s34, 0
      %p187 = por %p185, %p186
      %s189 = sadd.s32 %s188, 1
      %p192 = scmp.eq.s32.totalorder %s28, 1
      %p193 = scmp.ne.s32.totalorder %s188, %s190
      %p194 = scmp.eq.s32.totalorder %s28, 0
      %p195 = por %p193, %p194
      %p196 = scmp.ne.s32.totalorder %s188, %s190
      %p197 = scmp.eq.s32.totalorder %s33, 1
      %p198 = por %p196, %p197
      %p199 = scmp.ne.s32.totalorder %s190, %s191
      %p200 = scmp.eq.s32.totalorder %s33, 0
      %p201 = por %p199, %p200
      %p202 = scmp.ne.s32.totalorder %s190, %s191
      %p203 = scmp.eq.s32.totalorder %s34, 1
      %p204 = por %p202, %p203
      %p206 = scmp.ne.s32.totalorder %s191, %s205
      %p207 = scmp.eq.s32.totalorder %s34, 0
      %p208 = por %p206, %p207
      %s210 = sadd.s32 %s209, 1
      %p213 = scmp.eq.s32.totalorder %s28, 1
      %p214 = scmp.ne.s32.totalorder %s209, %s211
      %p215 = scmp.eq.s32.totalorder %s28, 0
      %p216 = por %p214, %p215
      %p217 = scmp.ne.s32.totalorder %s209, %s211
      %p218 = scmp.eq.s32.totalorder %s33, 1
      %p219 = por %p217, %p218
      %p220 = scmp.ne.s32.totalorder %s211, %s212
      %p221 = scmp.eq.s32.totalorder %s33, 0
      %p222 = por %p220, %p221
      %p223 = scmp.ne.s32.totalorder %s211, %s212
      %p224 = scmp.eq.s32.totalorder %s34, 1
      %p225 = por %p223, %p224
      %p227 = scmp.ne.s32.totalorder %s212, %s226
      %p228 = scmp.eq.s32.totalorder %s34, 0
      %p229 = por %p227, %p228
      %s231 = sadd.s32 %s230, 1
      %p234 = scmp.eq.s32.totalorder %s28, 1
      %p235 = scmp.ne.s32.totalorder %s230, %s232
      %p236 = scmp.eq.s32.totalorder %s28, 0
      %p237 = por %p235, %p236
      %p238 = scmp.ne.s32.totalorder %s230, %s232
      %p239 = scmp.eq.s32.totalorder %s33, 1
      %p240 = por %p238, %p239
      %p241 = scmp.ne.s32.totalorder %s232, %s233
      %p242 = scmp.eq.s32.totalorder %s33, 0
      %p243 = por %p241, %p242
      %p244 = scmp.ne.s32.totalorder %s232, %s233
      %p245 = scmp.eq.s32.totalorder %s34, 1
      %p246 = por %p244, %p245
      %p248 = scmp.ne.s32.totalorder %s233, %s247
      %p249 = scmp.eq.s32.totalorder %s34, 0
      %p250 = por %p248, %p249
      %s252 = sadd.s32 %s251, 1
      %p255 = scmp.eq.s32.totalorder %s28, 1
      %p256 = scmp.ne.s32.totalorder %s251, %s253
      %p257 = scmp.eq.s32.totalorder %s28, 0
      %p258 = por %p256, %p257
      %p259 = scmp.ne.s32.totalorder %s251, %s253
      %p260 = scmp.eq.s32.totalorder %s33, 1
      %p261 = por %p259, %p260
      %p262 = scmp.ne.s32.totalorder %s253, %s254
      %p263 = scmp.eq.s32.totalorder %s33, 0
      %p264 = por %p262, %p263
      %p265 = scmp.ne.s32.totalorder %s253, %s254
      %p266 = scmp.eq.s32.totalorder %s34, 1
      %p267 = por %p265, %p266
      %p269 = scmp.ne.s32.totalorder %s254, %s268
      %p270 = scmp.eq.s32.totalorder %s34, 0
      %p271 = por %p269, %p270
      %s272 = ssub.s32 %s28, %s35
      %p273 = scmp.eq.s32.totalorder %s272, 0
      %s275 = sadd.s32 %s274, 1
      %s276 = scalar_select %p273, %s274, %s275
      %p279 = pneg %p273
      %p280 = scmp.eq.s32.totalorder %s28, 1
      %p281 = por %p279, %p280
      %p282 = scmp.ne.s32.totalorder %s274, %s277
      %p283 = scmp.eq.s32.totalorder %s28, 0
      %p284 = por %p282, %p283
      %p285 = scmp.ne.s32.totalorder %s274, %s277
      %p286 = scmp.eq.s32.totalorder %s33, 1
      %p287 = por %p285, %p286
      %p288 = scmp.ne.s32.totalorder %s277, %s278
      %p289 = scmp.eq.s32.totalorder %s33, 0
      %p290 = por %p288, %p289
      %p291 = scmp.ne.s32.totalorder %s277, %s278
      %p292 = scmp.eq.s32.totalorder %s34, 1
      %p293 = por %p291, %p292
      %p295 = scmp.ne.s32.totalorder %s278, %s294
      %p296 = scmp.eq.s32.totalorder %s34, 0
      %p297 = por %p295, %p296
      %s298 = ssub.s32 %s28, %s35
      %p299 = scmp.eq.s32.totalorder %s298, 0
      %s301 = sadd.s32 %s300, 1
      %s302 = scalar_select %p299, %s300, %s301
      %p305 = pneg %p299
      %p306 = scmp.eq.s32.totalorder %s28, 1
      %p307 = por %p305, %p306
      %p308 = scmp.ne.s32.totalorder %s300, %s303
      %p309 = scmp.eq.s32.totalorder %s28, 0
      %p310 = por %p308, %p309
      %p311 = scmp.ne.s32.totalorder %s300, %s303
      %p312 = scmp.eq.s32.totalorder %s33, 1
      %p313 = por %p311, %p312
      %p314 = scmp.ne.s32.totalorder %s303, %s304
      %p315 = scmp.eq.s32.totalorder %s33, 0
      %p316 = por %p314, %p315
      %p317 = scmp.ne.s32.totalorder %s303, %s304
      %p318 = scmp.eq.s32.totalorder %s34, 1
      %p319 = por %p317, %p318
      %p321 = scmp.ne.s32.totalorder %s304, %s320
      %p322 = scmp.eq.s32.totalorder %s34, 0
      %p323 = por %p321, %p322
      %s325 = sadd.s32 %s324, 1
      %p328 = scmp.eq.s32.totalorder %s28, 1
      %p329 = scmp.ne.s32.totalorder %s324, %s326
      %p330 = scmp.eq.s32.totalorder %s28, 0
      %p331 = por %p329, %p330
      %p332 = scmp.ne.s32.totalorder %s324, %s326
      %p333 = scmp.eq.s32.totalorder %s33, 1
      %p334 = por %p332, %p333
      %p335 = scmp.ne.s32.totalorder %s326, %s327
      %p336 = scmp.eq.s32.totalorder %s33, 0
      %p337 = por %p335, %p336
      %p338 = scmp.ne.s32.totalorder %s326, %s327
      %p339 = scmp.eq.s32.totalorder %s34, 1
      %p340 = por %p338, %p339
      %p342 = scmp.ne.s32.totalorder %s327, %s341
      %p343 = scmp.eq.s32.totalorder %s34, 0
      %p344 = por %p342, %p343
      %s346 = sadd.s32 %s345, 1
      %p349 = scmp.eq.s32.totalorder %s28, 1
      %p350 = scmp.ne.s32.totalorder %s345, %s347
      %p351 = scmp.eq.s32.totalorder %s28, 0
      %p352 = por %p350, %p351
      %p353 = scmp.ne.s32.totalorder %s345, %s347
      %p354 = scmp.eq.s32.totalorder %s33, 1
      %p355 = por %p353, %p354
      %p356 = scmp.ne.s32.totalorder %s347, %s348
      %p357 = scmp.eq.s32.totalorder %s33, 0
      %p358 = por %p356, %p357
      %p359 = scmp.ne.s32.totalorder %s347, %s348
      %p360 = scmp.eq.s32.totalorder %s34, 1
      %p361 = por %p359, %p360
      %p363 = scmp.ne.s32.totalorder %s348, %s362
      %p364 = scmp.eq.s32.totalorder %s34, 0
      %p365 = por %p363, %p364
      %p366 = scmp.le.s32.totalorder 1, %s28
      %p367 = scmp.lt.s32.totalorder %s28, 3
      %p368 = pnand %p366, %p367
      %p369 = pneg %p368
      // Predicated region
      $region9: #{rnn_model_forward.1} parent=5 // pred_check
        _
      $region10: #{rnn_model_forward.1} parent=5 // pred_check_branch
        %371 = sbr.rel (%p368) target = $region12
      $region11: #{rnn_model_forward.1} parent=5 // pred_region
        %s372 = ssub.s32 %s28, 1
        // Predicated region
        $region13: #{rnn_model_forward.1} parent=11 // pred_check
          %p373 = pneg %p75
        $region14: #{rnn_model_forward.1} parent=11 // pred_check_branch
          %375 = sbr.rel (%p373) target = $region16
        $region15: #{rnn_model_forward.1} parent=11 // pred_region
          _
        $region16: #{rnn_model_forward.1} parent=11 // pred_fallthru
          _
        // Predicated region
        $region17: #{rnn_model_forward.1} parent=11 // pred_check
          %p376 = pneg %p96
        $region18: #{rnn_model_forward.1} parent=11 // pred_check_branch
          %378 = sbr.rel (%p376) target = $region20
        $region19: #{rnn_model_forward.1} parent=11 // pred_region
          _
        $region20: #{rnn_model_forward.1} parent=11 // pred_fallthru
          _
        // Predicated region
        $region21: #{rnn_model_forward.1} parent=11 // pred_check
          %p379 = pneg %p117
        $region22: #{rnn_model_forward.1} parent=11 // pred_check_branch
          %381 = sbr.rel (%p379) target = $region24
        $region23: #{rnn_model_forward.1} parent=11 // pred_region
          _
        $region24: #{rnn_model_forward.1} parent=11 // pred_fallthru
          _
        // Predicated region
        $region25: #{rnn_model_forward.1} parent=11 // pred_check
          %p382 = pneg %p138
        $region26: #{rnn_model_forward.1} parent=11 // pred_check_branch
          %384 = sbr.rel (%p382) target = $region28
        $region27: #{rnn_model_forward.1} parent=11 // pred_region
          _
        $region28: #{rnn_model_forward.1} parent=11 // pred_fallthru
          _
        // Predicated region
        $region29: #{rnn_model_forward.1} parent=11 // pred_check
          %p385 = pneg %p159
        $region30: #{rnn_model_forward.1} parent=11 // pred_check_branch
          %387 = sbr.rel (%p385) target = $region32
        $region31: #{rnn_model_forward.1} parent=11 // pred_region
          _
        $region32: #{rnn_model_forward.1} parent=11 // pred_fallthru
          _
        // Predicated region
        $region33: #{rnn_model_forward.1} parent=11 // pred_check
          %p388 = pneg %p180
        $region34: #{rnn_model_forward.1} parent=11 // pred_check_branch
          %390 = sbr.rel (%p388) target = $region36
        $region35: #{rnn_model_forward.1} parent=11 // pred_region
          _
        $region36: #{rnn_model_forward.1} parent=11 // pred_fallthru
          _
        // Predicated region
        $region37: #{rnn_model_forward.1} parent=11 // pred_check
          %p391 = pneg %p201
        $region38: #{rnn_model_forward.1} parent=11 // pred_check_branch
          %393 = sbr.rel (%p391) target = $region40
        $region39: #{rnn_model_forward.1} parent=11 // pred_region
          _
        $region40: #{rnn_model_forward.1} parent=11 // pred_fallthru
          _
        // Predicated region
        $region41: #{rnn_model_forward.1} parent=11 // pred_check
          %p394 = pneg %p222
        $region42: #{rnn_model_forward.1} parent=11 // pred_check_branch
          %396 = sbr.rel (%p394) target = $region44
        $region43: #{rnn_model_forward.1} parent=11 // pred_region
          _
        $region44: #{rnn_model_forward.1} parent=11 // pred_fallthru
          _
        // Predicated region
        $region45: #{rnn_model_forward.1} parent=11 // pred_check
          %p397 = pneg %p243
        $region46: #{rnn_model_forward.1} parent=11 // pred_check_branch
          %399 = sbr.rel (%p397) target = $region48
        $region47: #{rnn_model_forward.1} parent=11 // pred_region
          _
        $region48: #{rnn_model_forward.1} parent=11 // pred_fallthru
          _
        // Predicated region
        $region49: #{rnn_model_forward.1} parent=11 // pred_check
          %p400 = pneg %p264
        $region50: #{rnn_model_forward.1} parent=11 // pred_check_branch
          %402 = sbr.rel (%p400) target = $region52
        $region51: #{rnn_model_forward.1} parent=11 // pred_region
          _
        $region52: #{rnn_model_forward.1} parent=11 // pred_fallthru
          _
      $region12: #{rnn_model_forward.1} parent=5 // pred_fallthru
        _
      %p403 = scmp.lt.s32.totalorder %s28, 2
      // Predicated region
      $region53: #{rnn_model_forward.1} parent=5 // pred_check
        %p404 = pneg %p403
      $region54: #{rnn_model_forward.1} parent=5 // pred_check_branch
        %406 = sbr.rel (%p404) target = $region56
      $region55: #{rnn_model_forward.1} parent=5 // pred_region
        // Predicated region
        $region57: #{rnn_model_forward.1} parent=55 // pred_check
          %p407 = pneg %p48
        $region58: #{rnn_model_forward.1} parent=55 // pred_check_branch
          %409 = sbr.rel (%p407) target = $region60
        $region59: #{rnn_model_forward.1} parent=55 // pred_region
          %p410 = scmp.lt.s32.totalorder %s28, 1
          %s411 = scalar_select %p410, %s28, 1
          %s412 = smul.addr %s411, 4
          %s413 = scalar_lea.vmem %s0, %s412
        $region60: #{rnn_model_forward.1} parent=55 // pred_fallthru
          _
      $region56: #{rnn_model_forward.1} parent=5 // pred_fallthru
        _
      %p414 = scmp.le.s32.totalorder 1, %s28
      %p415 = scmp.lt.s32.totalorder %s28, 3
      %p416 = pnand %p414, %p415
      %p417 = pneg %p416
      // Predicated region
      $region61: #{rnn_model_forward.1} parent=5 // pred_check
        _
      $region62: #{rnn_model_forward.1} parent=5 // pred_check_branch
        %419 = sbr.rel (%p416) target = $region64
      $region63: #{rnn_model_forward.1} parent=5 // pred_region
        %s420 = ssub.s32 %s28, 1
        %p421 = scmp.lt.s32.totalorder %s33, 1
        %s422 = scalar_select %p421, %s33, 1
        %s423 = smul.addr %s422, 4
        %s424 = scalar_lea.vmem %s0, %s423
        %p425 = pneg %p54
        %p426 = pneg %p51
        %p427 = pneg %p75
        %p428 = pneg %p72
        %p429 = pneg %p96
        %p430 = pneg %p93
        %p431 = pneg %p117
        %p432 = pneg %p114
        %p433 = pneg %p138
        %p434 = pneg %p135
        %p435 = pneg %p159
        %p436 = pneg %p156
        %p437 = pneg %p180
        %p438 = pneg %p177
        %p439 = pneg %p201
        %p440 = pneg %p198
        %p441 = pneg %p222
        %p442 = pneg %p219
        %p443 = pneg %p243
        %p444 = pneg %p240
        %p445 = pneg %p264
        %p446 = pneg %p261
        %p447 = pneg %p290
        %p448 = pneg %p287
        %s449 = sand.u32 %s277, 1
        %s450 = scalar_lea.sflag [#allocation4], %s449
        %s451 = sand.u32 %s277, 1
        %s452 = smul.addr %s451, 8
        %s453 = scalar_lea.vmem [#allocation3], %s452
        %p454 = pneg %p316
        %p455 = pneg %p313
        %s456 = sand.u32 %s33, 1
        %s457 = scalar_lea.sflag [#allocation6], %s456
        %s458 = sand.u32 %s303, 1
        %s459 = smul.addr %s458, 8
        %s460 = scalar_lea.vmem [#allocation5], %s459
        %p461 = pneg %p337
        %p462 = pneg %p334
        %p463 = pneg %p358
        %p464 = pneg %p355
        %p465 = scmp.lt.s32.totalorder %s33, 1
        %s466 = scalar_select %p465, %s33, 1
        %s467 = smul.addr %s466, 4
        %s468 = scalar_lea.vmem %s0, %s467
        %p470 = scmp.eq.s32.totalorder %s33, 0
        // Predicated region
        $region65: #{rnn_model_forward.1} parent=63 // pred_check
          %p471 = pneg %p470
        $region66: #{rnn_model_forward.1} parent=63 // pred_check_branch
          %473 = sbr.rel (%p471) target = $region68
        $region67: #{rnn_model_forward.1} parent=63 // pred_region
          %v474 = vld [vmem:[%s1] sm:$0xf]
          %vm475 = vcmask 257024
          %476 = vst.msk [vmem:[#allocation7] sm:$0xf] %vm475, %v474
          %v477 = vld [vmem:[%s2] sm:$0xf]
          %478 = vst.msk [vmem:[#allocation8] sm:$0xf] %vm475, %v477
        $region68: #{rnn_model_forward.1} parent=63 // pred_fallthru
          _
        %v479 = vld [vmem:[%s468] sm:$0xf]
        %v480 = vld [vmem:[%s3] sm:$0xf]
        %v481 = vld [vmem:[%s3 + $0x4] sm:$0xf]
        %v482 = vld [vmem:[%s3 + $0x8] sm:$0xf]
        %v483 = vld [vmem:[%s3 + $0xc] sm:$0xf]
        %v484 = vld [vmem:[%s5] sm:$0x1]
        %v486 = vlaneseq
        %v487 = vshrl.u32 %v486, 7
        %v488 = vsub.s32 0, %v487
        %v489 = vrot.slane %v484, %v488
        %v495 = vunpack.c.l.b16 %v480
        %v496 = vunpack.c.l.b16 %v481
        %v497 = vunpack.c.l.b16 %v482
        %v498 = vunpack.c.l.b16 %v483
        %v499 = vpack.c.b16 %v496, %v495
        %v500 = vpack.c.b16 %v498, %v497
        %vm503 = vcmask 261120
        %v505 = vsel %vm503, %v479, 0
        %507 = vmatprep.subr.bf16.mxu0 0
        %508 = vmatpush1.bf16.msra.mxu0 %v499
        %509 = vmatprep.subr.bf16.mxu0 0
        %510 = vmatpush1.bf16.msra.mxu0 %v500
        %511 = vmatprep.subr.bf16.mxu0 0
        %512 = vmatpush1.bf16.msra.mxu0 0
        %513 = vmatprep.subr.bf16.mxu0 0
        %514 = vmatpush1.bf16.msra.mxu0 0
        %515 = vmatprep.subr.bf16.mxu0 0
        %516 = vmatpush1.bf16.msra.mxu0 0
        %517 = vmatprep.subr.bf16.mxu0 0
        %518 = vmatpush1.bf16.msra.mxu0 0
        %519 = vmatprep.subr.bf16.mxu0 0
        %520 = vmatpush1.bf16.msra.mxu0 0
        %521 = vmatprep.subr.bf16.mxu0 0
        %522 = vmatpush1.bf16.msra.mxu0 0
        %523 = vmatprep.subr.bf16.mxu0 0
        %524 = vmatpush1.bf16.msra.mxu0 0
        %525 = vmatprep.subr.bf16.mxu0 0
        %526 = vmatpush1.bf16.msra.mxu0 0
        %527 = vmatprep.subr.bf16.mxu0 0
        %528 = vmatpush1.bf16.msra.mxu0 0
        %529 = vmatprep.subr.bf16.mxu0 0
        %530 = vmatpush1.bf16.msra.mxu0 0
        %531 = vmatprep.subr.bf16.mxu0 0
        %532 = vmatpush1.bf16.msra.mxu0 0
        %533 = vmatprep.subr.bf16.mxu0 0
        %534 = vmatpush1.bf16.msra.mxu0 0
        %535 = vmatprep.subr.bf16.mxu0 0
        %536 = vmatpush1.bf16.msra.mxu0 0
        %537 = vmatprep.subr.bf16.mxu0 0
        %538 = vmatpush1.bf16.msra.mxu0 0
        %539 = vmatprep.mubr.bf16.mxu0 0
        %540 = vmatmul.mubr.bf16.gmra.mrb[0].mxu0 %v505
        %v541 = vpop.f32.mrb[0].mxu0
        %v542 = vadd.f32 %v489, %v541
        %v543 = vpop.f32.mrb[0].mxu0
        %v544 = vpop.f32.mrb[0].mxu0
        %v545 = vpop.f32.mrb[0].mxu0
        %546 = vdwg.mxu0
        %v547 = vld [vmem:[%s4] sm:$0xf]
        %v548 = vld [vmem:[%s4 + $0x4] sm:$0xf]
        %v549 = vld [vmem:[%s4 + $0x8] sm:$0xf]
        %v550 = vld [vmem:[%s4 + $0xc] sm:$0xf]
        %v551 = vld [vmem:[#allocation7] sm:$0x3]
        %v552 = vld [vmem:[#allocation8] sm:$0x3]
        %v553 = vpack.c.bf16 %v551, %v551
        %v558 = vunpack.c.l.b16 %v547
        %v559 = vunpack.c.l.b16 %v548
        %v560 = vunpack.c.l.b16 %v549
        %v561 = vunpack.c.l.b16 %v550
        %v562 = vpack.c.b16 %v559, %v558
        %v563 = vpack.c.b16 %v561, %v560
        %v567 = vsel %vm503, %v553, 0
        %569 = vmatprep.subr.bf16.mxu0 0
        %570 = vmatpush1.bf16.msra.mxu0 %v562
        %571 = vmatprep.subr.bf16.mxu0 0
        %572 = vmatpush1.bf16.msra.mxu0 %v563
        %573 = vmatprep.subr.bf16.mxu0 0
        %574 = vmatpush1.bf16.msra.mxu0 0
        %575 = vmatprep.subr.bf16.mxu0 0
        %576 = vmatpush1.bf16.msra.mxu0 0
        %577 = vmatprep.subr.bf16.mxu0 0
        %578 = vmatpush1.bf16.msra.mxu0 0
        %579 = vmatprep.subr.bf16.mxu0 0
        %580 = vmatpush1.bf16.msra.mxu0 0
        %581 = vmatprep.subr.bf16.mxu0 0
        %582 = vmatpush1.bf16.msra.mxu0 0
        %583 = vmatprep.subr.bf16.mxu0 0
        %584 = vmatpush1.bf16.msra.mxu0 0
        %585 = vmatprep.subr.bf16.mxu0 0
        %586 = vmatpush1.bf16.msra.mxu0 0
        %587 = vmatprep.subr.bf16.mxu0 0
        %588 = vmatpush1.bf16.msra.mxu0 0
        %589 = vmatprep.subr.bf16.mxu0 0
        %590 = vmatpush1.bf16.msra.mxu0 0
        %591 = vmatprep.subr.bf16.mxu0 0
        %592 = vmatpush1.bf16.msra.mxu0 0
        %593 = vmatprep.subr.bf16.mxu0 0
        %594 = vmatpush1.bf16.msra.mxu0 0
        %595 = vmatprep.subr.bf16.mxu0 0
        %596 = vmatpush1.bf16.msra.mxu0 0
        %597 = vmatprep.subr.bf16.mxu0 0
        %598 = vmatpush1.bf16.msra.mxu0 0
        %599 = vmatprep.subr.bf16.mxu0 0
        %600 = vmatpush1.bf16.msra.mxu0 0
        %601 = vmatprep.mubr.bf16.mxu0 0
        %602 = vmatmul.mubr.bf16.gmra.mrb[0].mxu0 %v567
        %v603 = vpop.f32.mrb[0].mxu0
        %v604 = vadd.f32 0.0, %v603
        %v605 = vpop.f32.mrb[0].mxu0
        %v606 = vpop.f32.mrb[0].mxu0
        %v607 = vpop.f32.mrb[0].mxu0
        %608 = vdwg.mxu0
        %v609 = vadd.f32 %v542, %v604
        %v610 = vxor.u32 %v609, 2147483648
        %v611 = vmul.f32 %v610, 1.442695
        %v612 = vpow.pop %v611
        %v613 = vadd.f32 %v612, 1.0
        %v614 = vrcp.pop %v613
        %v615 = vmul.f32 1.0, %v614
        %v616 = vtanh.pop %v609
        %618 = vrot.lane.b32.xlu0 %v552, 32
        %v619 = vpop.permute.xlu0 %618
        %v621 = vmul.f32 %v615, %v619
        %623 = vrot.lane.b32.xlu0 %v616, 32
        %v624 = vpop.permute.xlu0 %623
        %v626 = vmul.f32 %v615, %v624
        %628 = vrot.lane.b32.xlu0 %v626, 32
        %v629 = vpop.permute.xlu0 %628
        %v631 = vadd.f32 %v621, %v629
        %v632 = vtanh.pop %v631
        %634 = vrot.lane.b32.xlu0 %v632, 32
        %v635 = vpop.permute.xlu0 %634
        %v637 = vmul.f32 %v615, %v635
        %v638 = vpack.c.bf16 %v637, %v637
        %v640 = vunpack.c.l.b16 %v638
        %v641 = vpack.c.b16 %v640, %v640
        %642 = vrot.lane.b32.xlu0 %v641, 64
        %v643 = vpop.permute.xlu0 %642
        %vm645 = vcmask 253952
        %646 = vst.msk [vmem:[#allocation2] sm:$0x1] %vm645, %v643
        %647 = vrot.lane.b32.xlu0 %v638, 64
        %v648 = vpop.permute.xlu0 %647
        %v650 = vsel %vm503, %v648, 0
        %652 = vmatprep.subr.bf16.mxu0 0
        %653 = vmatpush1.bf16.msra.mxu0 %v562
        %654 = vmatprep.subr.bf16.mxu0 0
        %655 = vmatpush1.bf16.msra.mxu0 %v563
        %656 = vmatprep.subr.bf16.mxu0 0
        %657 = vmatpush1.bf16.msra.mxu0 0
        %658 = vmatprep.subr.bf16.mxu0 0
        %659 = vmatpush1.bf16.msra.mxu0 0
        %660 = vmatprep.subr.bf16.mxu0 0
        %661 = vmatpush1.bf16.msra.mxu0 0
        %662 = vmatprep.subr.bf16.mxu0 0
        %663 = vmatpush1.bf16.msra.mxu0 0
        %664 = vmatprep.subr.bf16.mxu0 0
        %665 = vmatpush1.bf16.msra.mxu0 0
        %666 = vmatprep.subr.bf16.mxu0 0
        %667 = vmatpush1.bf16.msra.mxu0 0
        %668 = vmatprep.subr.bf16.mxu0 0
        %669 = vmatpush1.bf16.msra.mxu0 0
        %670 = vmatprep.subr.bf16.mxu0 0
        %671 = vmatpush1.bf16.msra.mxu0 0
        %672 = vmatprep.subr.bf16.mxu0 0
        %673 = vmatpush1.bf16.msra.mxu0 0
        %674 = vmatprep.subr.bf16.mxu0 0
        %675 = vmatpush1.bf16.msra.mxu0 0
        %676 = vmatprep.subr.bf16.mxu0 0
        %677 = vmatpush1.bf16.msra.mxu0 0
        %678 = vmatprep.subr.bf16.mxu0 0
        %679 = vmatpush1.bf16.msra.mxu0 0
        %680 = vmatprep.subr.bf16.mxu0 0
        %681 = vmatpush1.bf16.msra.mxu0 0
        %682 = vmatprep.subr.bf16.mxu0 0
        %683 = vmatpush1.bf16.msra.mxu0 0
        %684 = vmatprep.mubr.bf16.mxu0 0
        %685 = vmatmul.mubr.bf16.gmra.mrb[0].mxu0 %v650
        %v686 = vpop.f32.mrb[0].mxu0
        %v687 = vadd.f32 0.0, %v686
        %v688 = vpop.f32.mrb[0].mxu0
        %v689 = vpop.f32.mrb[0].mxu0
        %v690 = vpop.f32.mrb[0].mxu0
        %691 = vdwg.mxu0
        %v693 = vrot.slane %v687, 6
        %v695 = vadd.f32 %v542, %v693
        %v696 = vxor.u32 %v695, 2147483648
        %v697 = vmul.f32 %v696, 1.442695
        %v698 = vpow.pop %v697
        %v699 = vadd.f32 %v698, 1.0
        %v700 = vrcp.pop %v699
        %v701 = vmul.f32 1.0, %v700
        %v702 = vtanh.pop %v695
        %v704 = vrot.slane %v631, 6
        %v706 = vmul.f32 %v701, %v704
        %708 = vrot.lane.b32.xlu0 %v702, 32
        %v709 = vpop.permute.xlu0 %708
        %v711 = vmul.f32 %v701, %v709
        %713 = vrot.lane.b32.xlu0 %v711, 32
        %v714 = vpop.permute.xlu0 %713
        %v716 = vadd.f32 %v706, %v714
        %v717 = vtanh.pop %v716
        %719 = vrot.lane.b32.xlu0 %v717, 32
        %v720 = vpop.permute.xlu0 %719
        %v722 = vmul.f32 %v701, %v720
        %v723 = vpack.c.bf16 %v722, %v722
        %v725 = vunpack.c.l.b16 %v723
        %v726 = vpack.c.b16 %v725, %v725
        %727 = vrot.lane.b32.xlu0 %v726, 64
        %v728 = vpop.permute.xlu0 %727
        %vm730 = vcmask 254977
        %731 = vst.msk [vmem:[#allocation2] sm:$0x2] %vm730, %v728
        %v732 = vrot.slane %v723, 1
        %733 = vrot.lane.b32.xlu0 %v732, 64
        %v734 = vpop.permute.xlu0 %733
        %v736 = vsel %vm503, %v734, 0
        %738 = vmatprep.subr.bf16.mxu0 0
        %739 = vmatpush1.bf16.msra.mxu0 %v562
        %740 = vmatprep.subr.bf16.mxu0 0
        %741 = vmatpush1.bf16.msra.mxu0 %v563
        %742 = vmatprep.subr.bf16.mxu0 0
        %743 = vmatpush1.bf16.msra.mxu0 0
        %744 = vmatprep.subr.bf16.mxu0 0
        %745 = vmatpush1.bf16.msra.mxu0 0
        %746 = vmatprep.subr.bf16.mxu0 0
        %747 = vmatpush1.bf16.msra.mxu0 0
        %748 = vmatprep.subr.bf16.mxu0 0
        %749 = vmatpush1.bf16.msra.mxu0 0
        %750 = vmatprep.subr.bf16.mxu0 0
        %751 = vmatpush1.bf16.msra.mxu0 0
        %752 = vmatprep.subr.bf16.mxu0 0
        %753 = vmatpush1.bf16.msra.mxu0 0
        %754 = vmatprep.subr.bf16.mxu0 0
        %755 = vmatpush1.bf16.msra.mxu0 0
        %756 = vmatprep.subr.bf16.mxu0 0
        %757 = vmatpush1.bf16.msra.mxu0 0
        %758 = vmatprep.subr.bf16.mxu0 0
        %759 = vmatpush1.bf16.msra.mxu0 0
        %760 = vmatprep.subr.bf16.mxu0 0
        %761 = vmatpush1.bf16.msra.mxu0 0
        %762 = vmatprep.subr.bf16.mxu0 0
        %763 = vmatpush1.bf16.msra.mxu0 0
        %764 = vmatprep.subr.bf16.mxu0 0
        %765 = vmatpush1.bf16.msra.mxu0 0
        %766 = vmatprep.subr.bf16.mxu0 0
        %767 = vmatpush1.bf16.msra.mxu0 0
        %768 = vmatprep.subr.bf16.mxu0 0
        %769 = vmatpush1.bf16.msra.mxu0 0
        %770 = vmatprep.mubr.bf16.mxu0 0
        %771 = vmatmul.mubr.bf16.gmra.mrb[0].mxu0 %v736
        %v772 = vpop.f32.mrb[0].mxu0
        %v773 = vadd.f32 0.0, %v772
        %v774 = vpop.f32.mrb[0].mxu0
        %v775 = vpop.f32.mrb[0].mxu0
        %v776 = vpop.f32.mrb[0].mxu0
        %777 = vdwg.mxu0
        %v779 = vrot.slane %v773, 4
        %v781 = vadd.f32 %v542, %v779
        %v782 = vxor.u32 %v781, 2147483648
        %v783 = vmul.f32 %v782, 1.442695
        %v784 = vpow.pop %v783
        %v785 = vadd.f32 %v784, 1.0
        %v786 = vrcp.pop %v785
        %v787 = vmul.f32 1.0, %v786
        %v788 = vtanh.pop %v781
        %v790 = vrot.slane %v716, 6
        %v792 = vmul.f32 %v787, %v790
        %794 = vrot.lane.b32.xlu0 %v788, 32
        %v795 = vpop.permute.xlu0 %794
        %v797 = vmul.f32 %v787, %v795
        %799 = vrot.lane.b32.xlu0 %v797, 32
        %v800 = vpop.permute.xlu0 %799
        %v802 = vadd.f32 %v792, %v800
        %v803 = vtanh.pop %v802
        %805 = vrot.lane.b32.xlu0 %v803, 32
        %v806 = vpop.permute.xlu0 %805
        %v808 = vmul.f32 %v787, %v806
        %v809 = vpack.c.bf16 %v808, %v808
        %v811 = vunpack.c.l.b16 %v809
        %v812 = vpack.c.b16 %v811, %v811
        %813 = vrot.lane.b32.xlu0 %v812, 64
        %v814 = vpop.permute.xlu0 %813
        %vm816 = vcmask 256002
        %817 = vst.msk [vmem:[#allocation2] sm:$0x4] %vm816, %v814
        %v818 = vrot.slane %v809, 2
        %819 = vrot.lane.b32.xlu0 %v818, 64
        %v820 = vpop.permute.xlu0 %819
        %v822 = vsel %vm503, %v820, 0
        %824 = vmatprep.subr.bf16.mxu0 0
        %825 = vmatpush1.bf16.msra.mxu0 %v562
        %826 = vmatprep.subr.bf16.mxu0 0
        %827 = vmatpush1.bf16.msra.mxu0 %v563
        %828 = vmatprep.subr.bf16.mxu0 0
        %829 = vmatpush1.bf16.msra.mxu0 0
        %830 = vmatprep.subr.bf16.mxu0 0
        %831 = vmatpush1.bf16.msra.mxu0 0
        %832 = vmatprep.subr.bf16.mxu0 0
        %833 = vmatpush1.bf16.msra.mxu0 0
        %834 = vmatprep.subr.bf16.mxu0 0
        %835 = vmatpush1.bf16.msra.mxu0 0
        %836 = vmatprep.subr.bf16.mxu0 0
        %837 = vmatpush1.bf16.msra.mxu0 0
        %838 = vmatprep.subr.bf16.mxu0 0
        %839 = vmatpush1.bf16.msra.mxu0 0
        %840 = vmatprep.subr.bf16.mxu0 0
        %841 = vmatpush1.bf16.msra.mxu0 0
        %842 = vmatprep.subr.bf16.mxu0 0
        %843 = vmatpush1.bf16.msra.mxu0 0
        %844 = vmatprep.subr.bf16.mxu0 0
        %845 = vmatpush1.bf16.msra.mxu0 0
        %846 = vmatprep.subr.bf16.mxu0 0
        %847 = vmatpush1.bf16.msra.mxu0 0
        %848 = vmatprep.subr.bf16.mxu0 0
        %849 = vmatpush1.bf16.msra.mxu0 0
        %850 = vmatprep.subr.bf16.mxu0 0
        %851 = vmatpush1.bf16.msra.mxu0 0
        %852 = vmatprep.subr.bf16.mxu0 0
        %853 = vmatpush1.bf16.msra.mxu0 0
        %854 = vmatprep.subr.bf16.mxu0 0
        %855 = vmatpush1.bf16.msra.mxu0 0
        %856 = vmatprep.mubr.bf16.mxu0 0
        %857 = vmatmul.mubr.bf16.gmra.mrb[0].mxu0 %v822
        %v858 = vpop.f32.mrb[0].mxu0
        %v859 = vadd.f32 0.0, %v858
        %v860 = vpop.f32.mrb[0].mxu0
        %v861 = vpop.f32.mrb[0].mxu0
        %v862 = vpop.f32.mrb[0].mxu0
        %863 = vdwg.mxu0
        %v865 = vrot.slane %v859, 2
        %v867 = vadd.f32 %v542, %v865
        %v868 = vxor.u32 %v867, 2147483648
        %v869 = vmul.f32 %v868, 1.442695
        %v870 = vpow.pop %v869
        %v871 = vadd.f32 %v870, 1.0
        %v872 = vrcp.pop %v871
        %v873 = vmul.f32 1.0, %v872
        %v874 = vtanh.pop %v867
        %v876 = vrot.slane %v802, 6
        %v878 = vmul.f32 %v873, %v876
        %880 = vrot.lane.b32.xlu0 %v874, 32
        %v881 = vpop.permute.xlu0 %880
        %v883 = vmul.f32 %v873, %v881
        %885 = vrot.lane.b32.xlu0 %v883, 32
        %v886 = vpop.permute.xlu0 %885
        %v888 = vadd.f32 %v878, %v886
        %v889 = vtanh.pop %v888
        %891 = vrot.lane.b32.xlu0 %v889, 32
        %v892 = vpop.permute.xlu0 %891
        %v894 = vmul.f32 %v873, %v892
        %v895 = vpack.c.bf16 %v894, %v894
        %v897 = vunpack.c.l.b16 %v895
        %v898 = vpack.c.b16 %v897, %v897
        %899 = vrot.lane.b32.xlu0 %v898, 64
        %v900 = vpop.permute.xlu0 %899
        %vm902 = vcmask 257027
        %903 = vst.msk [vmem:[#allocation2] sm:$0x8] %vm902, %v900
        %905 = vrot.lane.b32.xlu0 %v894, 64
        %v906 = vpop.permute.xlu0 %905
        %vm908 = vcmask 261126
        %909 = vst.msk [vmem:[#allocation7 - $0x6] sm:$0xc0] %vm908, %v906
        %911 = vrot.lane.b32.xlu0 %v888, 96
        %v912 = vpop.permute.xlu0 %911
        %914 = vst.msk [vmem:[#allocation8 - $0x6] sm:$0xc0] %vm908, %v912
        %v915 = vld [vmem:[#allocation2] sm:$0xf]
        %v916 = vld [vmem:[%s6] sm:$0xf]
        %v917 = vld [vmem:[%s6 + $0x4] sm:$0xf]
        %v918 = vld [vmem:[%s6 + $0x8] sm:$0xf]
        %v919 = vld [vmem:[%s6 + $0xc] sm:$0xf]
        %v920 = vld [vmem:[%s8] sm:$0x1]
        %v922 = vlaneseq
        %v923 = vshrl.u32 %v922, 7
        %v924 = vsub.s32 0, %v923
        %v925 = vrot.slane %v920, %v924
        %v931 = vunpack.c.l.b16 %v916
        %v932 = vunpack.c.l.b16 %v917
        %v933 = vunpack.c.l.b16 %v918
        %v934 = vunpack.c.l.b16 %v919
        %v935 = vpack.c.b16 %v932, %v931
        %v936 = vpack.c.b16 %v934, %v933
        %v940 = vsel %vm503, %v915, 0
        %942 = vmatprep.subr.bf16.mxu0 0
        %943 = vmatpush1.bf16.msra.mxu0 %v935
        %944 = vmatprep.subr.bf16.mxu0 0
        %945 = vmatpush1.bf16.msra.mxu0 %v936
        %946 = vmatprep.subr.bf16.mxu0 0
        %947 = vmatpush1.bf16.msra.mxu0 0
        %948 = vmatprep.subr.bf16.mxu0 0
        %949 = vmatpush1.bf16.msra.mxu0 0
        %950 = vmatprep.subr.bf16.mxu0 0
        %951 = vmatpush1.bf16.msra.mxu0 0
        %952 = vmatprep.subr.bf16.mxu0 0
        %953 = vmatpush1.bf16.msra.mxu0 0
        %954 = vmatprep.subr.bf16.mxu0 0
        %955 = vmatpush1.bf16.msra.mxu0 0
        %956 = vmatprep.subr.bf16.mxu0 0
        %957 = vmatpush1.bf16.msra.mxu0 0
        %958 = vmatprep.subr.bf16.mxu0 0
        %959 = vmatpush1.bf16.msra.mxu0 0
        %960 = vmatprep.subr.bf16.mxu0 0
        %961 = vmatpush1.bf16.msra.mxu0 0
        %962 = vmatprep.subr.bf16.mxu0 0
        %963 = vmatpush1.bf16.msra.mxu0 0
        %964 = vmatprep.subr.bf16.mxu0 0
        %965 = vmatpush1.bf16.msra.mxu0 0
        %966 = vmatprep.subr.bf16.mxu0 0
        %967 = vmatpush1.bf16.msra.mxu0 0
        %968 = vmatprep.subr.bf16.mxu0 0
        %969 = vmatpush1.bf16.msra.mxu0 0
        %970 = vmatprep.subr.bf16.mxu0 0
        %971 = vmatpush1.bf16.msra.mxu0 0
        %972 = vmatprep.subr.bf16.mxu0 0
        %973 = vmatpush1.bf16.msra.mxu0 0
        %974 = vmatprep.mubr.bf16.mxu0 0
        %975 = vmatmul.mubr.bf16.gmra.mrb[0].mxu0 %v940
        %v976 = vpop.f32.mrb[0].mxu0
        %v977 = vadd.f32 %v925, %v976
        %v978 = vpop.f32.mrb[0].mxu0
        %v979 = vpop.f32.mrb[0].mxu0
        %v980 = vpop.f32.mrb[0].mxu0
        %981 = vdwg.mxu0
        %v982 = vld [vmem:[%s7] sm:$0xf]
        %v983 = vld [vmem:[%s7 + $0x4] sm:$0xf]
        %v984 = vld [vmem:[%s7 + $0x8] sm:$0xf]
        %v985 = vld [vmem:[%s7 + $0xc] sm:$0xf]
        %v986 = vld [vmem:[#allocation7 + $0x2] sm:$0x3]
        %v987 = vld [vmem:[#allocation8 + $0x2] sm:$0x3]
        %v988 = vpack.c.bf16 %v986, %v986
        %v993 = vunpack.c.l.b16 %v982
        %v994 = vunpack.c.l.b16 %v983
        %v995 = vunpack.c.l.b16 %v984
        %v996 = vunpack.c.l.b16 %v985
        %v997 = vpack.c.b16 %v994, %v993
        %v998 = vpack.c.b16 %v996, %v995
        %v1002 = vsel %vm503, %v988, 0
        %1004 = vmatprep.subr.bf16.mxu0 0
        %1005 = vmatpush1.bf16.msra.mxu0 %v997
        %1006 = vmatprep.subr.bf16.mxu0 0
        %1007 = vmatpush1.bf16.msra.mxu0 %v998
        %1008 = vmatprep.subr.bf16.mxu0 0
        %1009 = vmatpush1.bf16.msra.mxu0 0
        %1010 = vmatprep.subr.bf16.mxu0 0
        %1011 = vmatpush1.bf16.msra.mxu0 0
        %1012 = vmatprep.subr.bf16.mxu0 0
        %1013 = vmatpush1.bf16.msra.mxu0 0
        %1014 = vmatprep.subr.bf16.mxu0 0
        %1015 = vmatpush1.bf16.msra.mxu0 0
        %1016 = vmatprep.subr.bf16.mxu0 0
        %1017 = vmatpush1.bf16.msra.mxu0 0
        %1018 = vmatprep.subr.bf16.mxu0 0
        %1019 = vmatpush1.bf16.msra.mxu0 0
        %1020 = vmatprep.subr.bf16.mxu0 0
        %1021 = vmatpush1.bf16.msra.mxu0 0
        %1022 = vmatprep.subr.bf16.mxu0 0
        %1023 = vmatpush1.bf16.msra.mxu0 0
        %1024 = vmatprep.subr.bf16.mxu0 0
        %1025 = vmatpush1.bf16.msra.mxu0 0
        %1026 = vmatprep.subr.bf16.mxu0 0
        %1027 = vmatpush1.bf16.msra.mxu0 0
        %1028 = vmatprep.subr.bf16.mxu0 0
        %1029 = vmatpush1.bf16.msra.mxu0 0
        %1030 = vmatprep.subr.bf16.mxu0 0
        %1031 = vmatpush1.bf16.msra.mxu0 0
        %1032 = vmatprep.subr.bf16.mxu0 0
        %1033 = vmatpush1.bf16.msra.mxu0 0
        %1034 = vmatprep.subr.bf16.mxu0 0
        %1035 = vmatpush1.bf16.msra.mxu0 0
        %1036 = vmatprep.mubr.bf16.mxu0 0
        %1037 = vmatmul.mubr.bf16.gmra.mrb[0].mxu0 %v1002
        %v1038 = vpop.f32.mrb[0].mxu0
        %v1039 = vadd.f32 0.0, %v1038
        %v1040 = vpop.f32.mrb[0].mxu0
        %v1041 = vpop.f32.mrb[0].mxu0
        %v1042 = vpop.f32.mrb[0].mxu0
        %1043 = vdwg.mxu0
        %v1044 = vadd.f32 %v977, %v1039
        %v1045 = vxor.u32 %v1044, 2147483648
        %v1046 = vmul.f32 %v1045, 1.442695
        %v1047 = vpow.pop %v1046
        %v1048 = vadd.f32 %v1047, 1.0
        %v1049 = vrcp.pop %v1048
        %v1050 = vmul.f32 1.0, %v1049
        %v1051 = vtanh.pop %v1044
        %1053 = vrot.lane.b32.xlu0 %v987, 32
        %v1054 = vpop.permute.xlu0 %1053
        %v1056 = vmul.f32 %v1050, %v1054
        %1058 = vrot.lane.b32.xlu0 %v1051, 32
        %v1059 = vpop.permute.xlu0 %1058
        %v1061 = vmul.f32 %v1050, %v1059
        %1063 = vrot.lane.b32.xlu0 %v1061, 32
        %v1064 = vpop.permute.xlu0 %1063
        %v1066 = vadd.f32 %v1056, %v1064
        %v1067 = vtanh.pop %v1066
        %1069 = vrot.lane.b32.xlu0 %v1067, 32
        %v1070 = vpop.permute.xlu0 %1069
        %v1072 = vmul.f32 %v1050, %v1070
        %v1073 = vpack.c.bf16 %v1072, %v1072
        %v1075 = vunpack.c.l.b16 %v1073
        %v1076 = vpack.c.b16 %v1075, %v1075
        %1077 = vrot.lane.b32.xlu0 %v1076, 64
        %v1078 = vpop.permute.xlu0 %1077
        %1080 = vst.msk [vmem:[#allocation2] sm:$0x1] %vm645, %v1078
        %1081 = vrot.lane.b32.xlu0 %v1073, 64
        %v1082 = vpop.permute.xlu0 %1081
        %v1084 = vsel %vm503, %v1082, 0
        %1086 = vmatprep.subr.bf16.mxu0 0
        %1087 = vmatpush1.bf16.msra.mxu0 %v997
        %1088 = vmatprep.subr.bf16.mxu0 0
        %1089 = vmatpush1.bf16.msra.mxu0 %v998
        %1090 = vmatprep.subr.bf16.mxu0 0
        %1091 = vmatpush1.bf16.msra.mxu0 0
        %1092 = vmatprep.subr.bf16.mxu0 0
        %1093 = vmatpush1.bf16.msra.mxu0 0
        %1094 = vmatprep.subr.bf16.mxu0 0
        %1095 = vmatpush1.bf16.msra.mxu0 0
        %1096 = vmatprep.subr.bf16.mxu0 0
        %1097 = vmatpush1.bf16.msra.mxu0 0
        %1098 = vmatprep.subr.bf16.mxu0 0
        %1099 = vmatpush1.bf16.msra.mxu0 0
        %1100 = vmatprep.subr.bf16.mxu0 0
        %1101 = vmatpush1.bf16.msra.mxu0 0
        %1102 = vmatprep.subr.bf16.mxu0 0
        %1103 = vmatpush1.bf16.msra.mxu0 0
        %1104 = vmatprep.subr.bf16.mxu0 0
        %1105 = vmatpush1.bf16.msra.mxu0 0
        %1106 = vmatprep.subr.bf16.mxu0 0
        %1107 = vmatpush1.bf16.msra.mxu0 0
        %1108 = vmatprep.subr.bf16.mxu0 0
        %1109 = vmatpush1.bf16.msra.mxu0 0
        %1110 = vmatprep.subr.bf16.mxu0 0
        %1111 = vmatpush1.bf16.msra.mxu0 0
        %1112 = vmatprep.subr.bf16.mxu0 0
        %1113 = vmatpush1.bf16.msra.mxu0 0
        %1114 = vmatprep.subr.bf16.mxu0 0
        %1115 = vmatpush1.bf16.msra.mxu0 0
        %1116 = vmatprep.subr.bf16.mxu0 0
        %1117 = vmatpush1.bf16.msra.mxu0 0
        %1118 = vmatprep.mubr.bf16.mxu0 0
        %1119 = vmatmul.mubr.bf16.gmra.mrb[0].mxu0 %v1084
        %v1120 = vpop.f32.mrb[0].mxu0
        %v1121 = vadd.f32 0.0, %v1120
        %v1122 = vpop.f32.mrb[0].mxu0
        %v1123 = vpop.f32.mrb[0].mxu0
        %v1124 = vpop.f32.mrb[0].mxu0
        %1125 = vdwg.mxu0
        %v1127 = vrot.slane %v1121, 6
        %v1129 = vadd.f32 %v977, %v1127
        %v1130 = vxor.u32 %v1129, 2147483648
        %v1131 = vmul.f32 %v1130, 1.442695
        %v1132 = vpow.pop %v1131
        %v1133 = vadd.f32 %v1132, 1.0
        %v1134 = vrcp.pop %v1133
        %v1135 = vmul.f32 1.0, %v1134
        %v1136 = vtanh.pop %v1129
        %v1138 = vrot.slane %v1066, 6
        %v1140 = vmul.f32 %v1135, %v1138
        %1142 = vrot.lane.b32.xlu0 %v1136, 32
        %v1143 = vpop.permute.xlu0 %1142
        %v1145 = vmul.f32 %v1135, %v1143
        %1147 = vrot.lane.b32.xlu0 %v1145, 32
        %v1148 = vpop.permute.xlu0 %1147
        %v1150 = vadd.f32 %v1140, %v1148
        %v1151 = vtanh.pop %v1150
        %1153 = vrot.lane.b32.xlu0 %v1151, 32
        %v1154 = vpop.permute.xlu0 %1153
        %v1156 = vmul.f32 %v1135, %v1154
        %v1157 = vpack.c.bf16 %v1156, %v1156
        %v1159 = vunpack.c.l.b16 %v1157
        %v1160 = vpack.c.b16 %v1159, %v1159
        %1161 = vrot.lane.b32.xlu0 %v1160, 64
        %v1162 = vpop.permute.xlu0 %1161
        %1164 = vst.msk [vmem:[#allocation2] sm:$0x2] %vm730, %v1162
        %v1165 = vrot.slane %v1157, 1
        %1166 = vrot.lane.b32.xlu0 %v1165, 64
        %v1167 = vpop.permute.xlu0 %1166
        %v1169 = vsel %vm503, %v1167, 0
        %1171 = vmatprep.subr.bf16.mxu0 0
        %1172 = vmatpush1.bf16.msra.mxu0 %v997
        %1173 = vmatprep.subr.bf16.mxu0 0
        %1174 = vmatpush1.bf16.msra.mxu0 %v998
        %1175 = vmatprep.subr.bf16.mxu0 0
        %1176 = vmatpush1.bf16.msra.mxu0 0
        %1177 = vmatprep.subr.bf16.mxu0 0
        %1178 = vmatpush1.bf16.msra.mxu0 0
        %1179 = vmatprep.subr.bf16.mxu0 0
        %1180 = vmatpush1.bf16.msra.mxu0 0
        %1181 = vmatprep.subr.bf16.mxu0 0
        %1182 = vmatpush1.bf16.msra.mxu0 0
        %1183 = vmatprep.subr.bf16.mxu0 0
        %1184 = vmatpush1.bf16.msra.mxu0 0
        %1185 = vmatprep.subr.bf16.mxu0 0
        %1186 = vmatpush1.bf16.msra.mxu0 0
        %1187 = vmatprep.subr.bf16.mxu0 0
        %1188 = vmatpush1.bf16.msra.mxu0 0
        %1189 = vmatprep.subr.bf16.mxu0 0
        %1190 = vmatpush1.bf16.msra.mxu0 0
        %1191 = vmatprep.subr.bf16.mxu0 0
        %1192 = vmatpush1.bf16.msra.mxu0 0
        %1193 = vmatprep.subr.bf16.mxu0 0
        %1194 = vmatpush1.bf16.msra.mxu0 0
        %1195 = vmatprep.subr.bf16.mxu0 0
        %1196 = vmatpush1.bf16.msra.mxu0 0
        %1197 = vmatprep.subr.bf16.mxu0 0
        %1198 = vmatpush1.bf16.msra.mxu0 0
        %1199 = vmatprep.subr.bf16.mxu0 0
        %1200 = vmatpush1.bf16.msra.mxu0 0
        %1201 = vmatprep.subr.bf16.mxu0 0
        %1202 = vmatpush1.bf16.msra.mxu0 0
        %1203 = vmatprep.mubr.bf16.mxu0 0
        %1204 = vmatmul.mubr.bf16.gmra.mrb[0].mxu0 %v1169
        %v1205 = vpop.f32.mrb[0].mxu0
        %v1206 = vadd.f32 0.0, %v1205
        %v1207 = vpop.f32.mrb[0].mxu0
        %v1208 = vpop.f32.mrb[0].mxu0
        %v1209 = vpop.f32.mrb[0].mxu0
        %1210 = vdwg.mxu0
        %v1212 = vrot.slane %v1206, 4
        %v1214 = vadd.f32 %v977, %v1212
        %v1215 = vxor.u32 %v1214, 2147483648
        %v1216 = vmul.f32 %v1215, 1.442695
        %v1217 = vpow.pop %v1216
        %v1218 = vadd.f32 %v1217, 1.0
        %v1219 = vrcp.pop %v1218
        %v1220 = vmul.f32 1.0, %v1219
        %v1221 = vtanh.pop %v1214
        %v1223 = vrot.slane %v1150, 6
        %v1225 = vmul.f32 %v1220, %v1223
        %1227 = vrot.lane.b32.xlu0 %v1221, 32
        %v1228 = vpop.permute.xlu0 %1227
        %v1230 = vmul.f32 %v1220, %v1228
        %1232 = vrot.lane.b32.xlu0 %v1230, 32
        %v1233 = vpop.permute.xlu0 %1232
        %v1235 = vadd.f32 %v1225, %v1233
        %v1236 = vtanh.pop %v1235
        %1238 = vrot.lane.b32.xlu0 %v1236, 32
        %v1239 = vpop.permute.xlu0 %1238
        %v1241 = vmul.f32 %v1220, %v1239
        %v1242 = vpack.c.bf16 %v1241, %v1241
        %v1244 = vunpack.c.l.b16 %v1242
        %v1245 = vpack.c.b16 %v1244, %v1244
        %1246 = vrot.lane.b32.xlu0 %v1245, 64
        %v1247 = vpop.permute.xlu0 %1246
        %1249 = vst.msk [vmem:[#allocation2] sm:$0x4] %vm816, %v1247
        %v1250 = vrot.slane %v1242, 2
        %1251 = vrot.lane.b32.xlu0 %v1250, 64
        %v1252 = vpop.permute.xlu0 %1251
        %v1254 = vsel %vm503, %v1252, 0
        %1256 = vmatprep.subr.bf16.mxu0 0
        %1257 = vmatpush1.bf16.msra.mxu0 %v997
        %1258 = vmatprep.subr.bf16.mxu0 0
        %1259 = vmatpush1.bf16.msra.mxu0 %v998
        %1260 = vmatprep.subr.bf16.mxu0 0
        %1261 = vmatpush1.bf16.msra.mxu0 0
        %1262 = vmatprep.subr.bf16.mxu0 0
        %1263 = vmatpush1.bf16.msra.mxu0 0
        %1264 = vmatprep.subr.bf16.mxu0 0
        %1265 = vmatpush1.bf16.msra.mxu0 0
        %1266 = vmatprep.subr.bf16.mxu0 0
        %1267 = vmatpush1.bf16.msra.mxu0 0
        %1268 = vmatprep.subr.bf16.mxu0 0
        %1269 = vmatpush1.bf16.msra.mxu0 0
        %1270 = vmatprep.subr.bf16.mxu0 0
        %1271 = vmatpush1.bf16.msra.mxu0 0
        %1272 = vmatprep.subr.bf16.mxu0 0
        %1273 = vmatpush1.bf16.msra.mxu0 0
        %1274 = vmatprep.subr.bf16.mxu0 0
        %1275 = vmatpush1.bf16.msra.mxu0 0
        %1276 = vmatprep.subr.bf16.mxu0 0
        %1277 = vmatpush1.bf16.msra.mxu0 0
        %1278 = vmatprep.subr.bf16.mxu0 0
        %1279 = vmatpush1.bf16.msra.mxu0 0
        %1280 = vmatprep.subr.bf16.mxu0 0
        %1281 = vmatpush1.bf16.msra.mxu0 0
        %1282 = vmatprep.subr.bf16.mxu0 0
        %1283 = vmatpush1.bf16.msra.mxu0 0
        %1284 = vmatprep.subr.bf16.mxu0 0
        %1285 = vmatpush1.bf16.msra.mxu0 0
        %1286 = vmatprep.subr.bf16.mxu0 0
        %1287 = vmatpush1.bf16.msra.mxu0 0
        %1288 = vmatprep.mubr.bf16.mxu0 0
        %1289 = vmatmul.mubr.bf16.gmra.mrb[0].mxu0 %v1254
        %v1290 = vpop.f32.mrb[0].mxu0
        %v1291 = vadd.f32 0.0, %v1290
        %v1292 = vpop.f32.mrb[0].mxu0
        %v1293 = vpop.f32.mrb[0].mxu0
        %v1294 = vpop.f32.mrb[0].mxu0
        %1295 = vdwg.mxu0
        %v1297 = vrot.slane %v1291, 2
        %v1299 = vadd.f32 %v977, %v1297
        %v1300 = vxor.u32 %v1299, 2147483648
        %v1301 = vmul.f32 %v1300, 1.442695
        %v1302 = vpow.pop %v1301
        %v1303 = vadd.f32 %v1302, 1.0
        %v1304 = vrcp.pop %v1303
        %v1305 = vmul.f32 1.0, %v1304
        %v1306 = vtanh.pop %v1299
        %v1308 = vrot.slane %v1235, 6
        %v1310 = vmul.f32 %v1305, %v1308
        %1312 = vrot.lane.b32.xlu0 %v1306, 32
        %v1313 = vpop.permute.xlu0 %1312
        %v1315 = vmul.f32 %v1305, %v1313
        %1317 = vrot.lane.b32.xlu0 %v1315, 32
        %v1318 = vpop.permute.xlu0 %1317
        %v1320 = vadd.f32 %v1310, %v1318
        %v1321 = vtanh.pop %v1320
        %1323 = vrot.lane.b32.xlu0 %v1321, 32
        %v1324 = vpop.permute.xlu0 %1323
        %v1326 = vmul.f32 %v1305, %v1324
        %v1327 = vpack.c.bf16 %v1326, %v1326
        %v1329 = vunpack.c.l.b16 %v1327
        %v1330 = vpack.c.b16 %v1329, %v1329
        %1331 = vrot.lane.b32.xlu0 %v1330, 64
        %v1332 = vpop.permute.xlu0 %1331
        %1334 = vst.msk [vmem:[#allocation2] sm:$0x8] %vm902, %v1332
        %1336 = vrot.lane.b32.xlu0 %v1326, 64
        %v1337 = vpop.permute.xlu0 %1336
        %1339 = vst.msk [vmem:[#allocation7 - $0x4] sm:$0xc0] %vm908, %v1337
        %1341 = vrot.lane.b32.xlu0 %v1320, 96
        %v1342 = vpop.permute.xlu0 %1341
        %1344 = vst.msk [vmem:[#allocation8 - $0x4] sm:$0xc0] %vm908, %v1342
        %v1345 = vld [vmem:[#allocation2] sm:$0xf]
        %v1346 = vunpack.c.l.bf16 %v1345
        %1347 = vst.msk [vmem:[%s453] sm:$0xff] %vm503, %v1346
        %v1348 = vld [vmem:[%s9] sm:$0xf]
        %v1349 = vld [vmem:[%s9 + $0x4] sm:$0xf]
        %v1350 = vld [vmem:[%s9 + $0x8] sm:$0xf]
        %v1351 = vld [vmem:[%s9 + $0xc] sm:$0xf]
        %v1352 = vld [vmem:[%s10] sm:$0x1]
        %v1354 = vlaneseq
        %v1355 = vshrl.u32 %v1354, 7
        %v1356 = vsub.s32 0, %v1355
        %v1357 = vrot.slane %v1352, %v1356
        %v1363 = vunpack.c.l.b16 %v1348
        %v1364 = vunpack.c.l.b16 %v1349
        %v1365 = vunpack.c.l.b16 %v1350
        %v1366 = vunpack.c.l.b16 %v1351
        %v1367 = vpack.c.b16 %v1364, %v1363
        %v1368 = vpack.c.b16 %v1366, %v1365
        %v1372 = vsel %vm503, %v1345, 0
        %1374 = vmatprep.subr.bf16.mxu0 0
        %1375 = vmatpush1.bf16.msra.mxu0 %v1367
        %1376 = vmatprep.subr.bf16.mxu0 0
        %1377 = vmatpush1.bf16.msra.mxu0 %v1368
        %1378 = vmatprep.subr.bf16.mxu0 0
        %1379 = vmatpush1.bf16.msra.mxu0 0
        %1380 = vmatprep.subr.bf16.mxu0 0
        %1381 = vmatpush1.bf16.msra.mxu0 0
        %1382 = vmatprep.subr.bf16.mxu0 0
        %1383 = vmatpush1.bf16.msra.mxu0 0
        %1384 = vmatprep.subr.bf16.mxu0 0
        %1385 = vmatpush1.bf16.msra.mxu0 0
        %1386 = vmatprep.subr.bf16.mxu0 0
        %1387 = vmatpush1.bf16.msra.mxu0 0
        %1388 = vmatprep.subr.bf16.mxu0 0
        %1389 = vmatpush1.bf16.msra.mxu0 0
        %1390 = vmatprep.subr.bf16.mxu0 0
        %1391 = vmatpush1.bf16.msra.mxu0 0
        %1392 = vmatprep.subr.bf16.mxu0 0
        %1393 = vmatpush1.bf16.msra.mxu0 0
        %1394 = vmatprep.subr.bf16.mxu0 0
        %1395 = vmatpush1.bf16.msra.mxu0 0
        %1396 = vmatprep.subr.bf16.mxu0 0
        %1397 = vmatpush1.bf16.msra.mxu0 0
        %1398 = vmatprep.subr.bf16.mxu0 0
        %1399 = vmatpush1.bf16.msra.mxu0 0
        %1400 = vmatprep.subr.bf16.mxu0 0
        %1401 = vmatpush1.bf16.msra.mxu0 0
        %1402 = vmatprep.subr.bf16.mxu0 0
        %1403 = vmatpush1.bf16.msra.mxu0 0
        %1404 = vmatprep.subr.bf16.mxu0 0
        %1405 = vmatpush1.bf16.msra.mxu0 0
        %1406 = vmatprep.mubr.bf16.mxu0 0
        %1407 = vmatmul.mubr.bf16.gmra.mrb[0].mxu0 %v1372
        %v1408 = vpop.f32.mrb[0].mxu0
        %v1409 = vadd.f32 %v1357, %v1408
        %v1410 = vpop.f32.mrb[0].mxu0
        %v1411 = vpop.f32.mrb[0].mxu0
        %v1412 = vpop.f32.mrb[0].mxu0
        %1413 = vdwg.mxu0
        %1414 = vst [vmem:[%s460] sm:$0xff] %v1409
        %s1415 = sand.u32 %s277, 1
        %s1416 = scalar_lea.sflag [#allocation4], %s1415
        %s1417 = sand.u32 %s277, 1
        %s1418 = smul.addr %s1417, 8
        %s1419 = scalar_lea.vmem [#allocation3], %s1418
        %s1420 = sand.u32 %s33, 1
        %s1421 = scalar_lea.sflag [#allocation6], %s1420
        %s1422 = sand.u32 %s303, 1
        %s1423 = smul.addr %s1422, 8
        %s1424 = scalar_lea.vmem [#allocation5], %s1423
        // Predicated region
        $region69: #{rnn_model_forward.1} parent=63 // pred_check
          %p1425 = pneg %p287
        $region70: #{rnn_model_forward.1} parent=63 // pred_check_branch
          %1427 = sbr.rel (%p1425) target = $region72
        $region71: #{rnn_model_forward.1} parent=63 // pred_region
          %s1429 = ssub.s32 128, 128
          %1430 = vsyncadd %s1416, %s1429
          %s1431 = smul.addr %s33, 128
          %s1432 = scalar_lea.hbm %s11, %s1431
          %s1434 = sshll.u32 %s1419, 4
          %s1435 = int_to_ptr.vmem [resolvable:$true] %s1434
          %1437 = dma.vmem_to_hbm [thread:$0]  %s1435, 128, %s1432, %s1416
        $region72: #{rnn_model_forward.1} parent=63 // pred_fallthru
          _
        // Predicated region
        $region73: #{rnn_model_forward.1} parent=63 // pred_check
          %p1438 = pneg %p313
        $region74: #{rnn_model_forward.1} parent=63 // pred_check_branch
          %1440 = sbr.rel (%p1438) target = $region76
        $region75: #{rnn_model_forward.1} parent=63 // pred_region
          %s1442 = ssub.s32 128, 128
          %1443 = vsyncadd %s1421, %s1442
          %s1444 = smul.addr %s33, 128
          %s1445 = scalar_lea.hbm %s12, %s1444
          %s1447 = sshll.u32 %s1424, 4
          %s1448 = int_to_ptr.vmem [resolvable:$true] %s1447
          %1450 = dma.vmem_to_hbm [thread:$0]  %s1448, 128, %s1445, %s1421
        $region76: #{rnn_model_forward.1} parent=63 // pred_fallthru
          _
        // Predicated region
        $region77: #{rnn_model_forward.1} parent=63 // pred_check
          %p1451 = pneg %p334
        $region78: #{rnn_model_forward.1} parent=63 // pred_check_branch
          %1453 = sbr.rel (%p1451) target = $region80
        $region79: #{rnn_model_forward.1} parent=63 // pred_region
          %s1455 = ssub.s32 64, 64
          %1456 = vsyncadd [#allocation6], %s1455
          %s1458 = sshll.u32 [#allocation7], 4
          %s1459 = int_to_ptr.vmem [resolvable:$true] %s1458
          %1461 = dma.vmem_to_hbm [thread:$0]  %s1459, 64, %s13, [#allocation6]
        $region80: #{rnn_model_forward.1} parent=63 // pred_fallthru
          _
        // Predicated region
        $region81: #{rnn_model_forward.1} parent=63 // pred_check
          %p1462 = pneg %p355
        $region82: #{rnn_model_forward.1} parent=63 // pred_check_branch
          %1464 = sbr.rel (%p1462) target = $region84
        $region83: #{rnn_model_forward.1} parent=63 // pred_region
          %s1466 = ssub.s32 64, 64
          %1467 = vsyncadd [#allocation9], %s1466
          %s1469 = sshll.u32 [#allocation8], 4
          %s1470 = int_to_ptr.vmem [resolvable:$true] %s1469
          %1472 = dma.vmem_to_hbm [thread:$0]  %s1470, 64, %s14, [#allocation9]
        $region84: #{rnn_model_forward.1} parent=63 // pred_fallthru
          _
        // Predicated region
        $region85: #{rnn_model_forward.1} parent=63 // pred_check
          %p1473 = pneg %p334
        $region86: #{rnn_model_forward.1} parent=63 // pred_check_branch
          %1475 = sbr.rel (%p1473) target = $region88
        $region87: #{rnn_model_forward.1} parent=63 // pred_region
          %1476 = dma.done [#allocation6], 64
        $region88: #{rnn_model_forward.1} parent=63 // pred_fallthru
          _
        // Predicated region
        $region89: #{rnn_model_forward.1} parent=63 // pred_check
          %p1477 = pneg %p355
        $region90: #{rnn_model_forward.1} parent=63 // pred_check_branch
          %1479 = sbr.rel (%p1477) target = $region92
        $region91: #{rnn_model_forward.1} parent=63 // pred_region
          %1480 = dma.done [#allocation9], 64
        $region92: #{rnn_model_forward.1} parent=63 // pred_fallthru
          _
      $region64: #{rnn_model_forward.1} parent=5 // pred_fallthru
        _
      %p1481 = scmp.le.s32.totalorder 2, %s28
      // Predicated region
      $region93: #{rnn_model_forward.1} parent=5 // pred_check
        %p1482 = pneg %p1481
      $region94: #{rnn_model_forward.1} parent=5 // pred_check_branch
        %1484 = sbr.rel (%p1482) target = $region96
      $region95: #{rnn_model_forward.1} parent=5 // pred_region
        %s1485 = ssub.s32 %s28, 2
        // Predicated region
        $region97: #{rnn_model_forward.1} parent=95 // pred_check
          %p1486 = pneg %p293
        $region98: #{rnn_model_forward.1} parent=95 // pred_check_branch
          %1488 = sbr.rel (%p1486) target = $region100
        $region99: #{rnn_model_forward.1} parent=95 // pred_region
          %s1489 = sand.u32 %s278, 1
          %s1490 = scalar_lea.sflag [#allocation4], %s1489
          %s1491 = sand.u32 %s278, 1
          %s1492 = smul.addr %s1491, 8
          %s1493 = scalar_lea.vmem [#allocation3], %s1492
          %1494 = dma.done %s1490, 128
        $region100: #{rnn_model_forward.1} parent=95 // pred_fallthru
          _
        // Predicated region
        $region101: #{rnn_model_forward.1} parent=95 // pred_check
          %p1495 = pneg %p319
        $region102: #{rnn_model_forward.1} parent=95 // pred_check_branch
          %1497 = sbr.rel (%p1495) target = $region104
        $region103: #{rnn_model_forward.1} parent=95 // pred_region
          %s1498 = sand.u32 %s34, 1
          %s1499 = scalar_lea.sflag [#allocation6], %s1498
          %s1500 = sand.u32 %s304, 1
          %s1501 = smul.addr %s1500, 8
          %s1502 = scalar_lea.vmem [#allocation5], %s1501
          %1503 = dma.done %s1499, 128
        $region104: #{rnn_model_forward.1} parent=95 // pred_fallthru
          _
      $region96: #{rnn_model_forward.1} parent=5 // pred_fallthru
        _
    $region6: #{rnn_model_forward.1} parent=1 // loop_footer
      %s32 = sadd.s32 1, %s28
    $region7: #{rnn_model_forward.1} parent=1 // loop_footer_branch
      %27 = sbr.rel target = $region3
    $region8: #{rnn_model_forward.1} parent=1 // loop_exit
      _
    %1504 = vsyncpa [#allocation4], 1
    %s1505 = scalar_lea.sflag [#allocation4], 1
    %1506 = vsyncpa %s1505, 1
    %1507 = vsyncpa [#allocation6], 1
    %s1508 = scalar_lea.sflag [#allocation6], 1
    %1509 = vsyncpa %s1508, 1
    %1510 = vsyncpa [#allocation9], 1

</llo_original>
